<compile_context>
chip_gen: v5e
topology: v5e:2x2
jax: 0.10.0
libtpu: 0.0.40
codegen_flags: <defaults>
</compile_context>

<pallas_src>
import functools

import jax
import jax.numpy as jnp
from jax import lax
from jax.experimental import pallas as pl
from jax.experimental.pallas import tpu as pltpu

_NEG = -1e9  # "minus infinity" for padded tag / class slots (finite -> no NaN)


def _round_up(x, m):
    return ((x + m - 1) // m) * m


def _place(values, shape, fill=0.0, dtype=jnp.float32):
    """Embed `values` in the top-left corner of a `fill`-initialised array."""
    out = jnp.full(shape, fill, dtype)
    return out.at[tuple(slice(0, d) for d in values.shape)].set(
        values.astype(dtype))


def _masked_softmax_xent(logits, labels, n_valid, ignore_index):
    """PyTorch CrossEntropyLoss(reduction='mean').  Layout: classes on
    sublanes (axis 0), samples on lanes (axis 1).  Padded class rows must hold
    _NEG; padded sample columns are excluded via `n_valid`."""
    C, N = logits.shape
    oh = (lax.broadcasted_iota(jnp.int32, (C, N), 0) == labels
          ).astype(jnp.float32)
    mx = jnp.max(logits, axis=0, keepdims=True)
    lse = mx + jnp.log(jnp.sum(jnp.exp(logits - mx), axis=0, keepdims=True))
    gold = jnp.sum(logits * oh, axis=0, keepdims=True)
    nll = lse - gold                                              # (1, N)
    valid = (lax.broadcasted_iota(jnp.int32, (1, N), 1) < n_valid
             ).astype(jnp.float32)
    if ignore_index is not None:
        valid = valid * (labels != ignore_index).astype(jnp.float32)
    # Guard against an all-ignored batch (would otherwise emit NaN).
    return jnp.sum(nll * valid) / jnp.maximum(jnp.sum(valid), 1.0)


def _fused_loss_kernel(em_ref, tag_ref, msk_ref, start_ref, end_ref, tt_ref,
                       elog_ref, elab_ref, ilog_ref, ilab_ref,
                       out_ref,
                       alpha_sc, gold_sc, prev_oh_sc, last_oh_sc,
                       etr_sc, mt_sc,
                       *, batch, n_entity, n_intent, seq_block):
    s = pl.program_id(0)
    ns = pl.num_programs(0)
    T, B = alpha_sc.shape              # padded tag count (sublanes), batch (lanes)

    iota_t = lax.broadcasted_iota(jnp.int32, (T, B), 0)   # hoisted out of steps
    tt = tt_ref[...]                   # (T, T) == transitions.T  (to, from)

    def load(j):
        em = em_ref[j]                                     # (T, B)
        oh = (iota_t == tag_ref[j]).astype(jnp.float32)    # one-hot of tags[j]
        msk = msk_ref[j]                                   # (1, B)
        return em, msk, oh

    em0, msk0, oh0 = load(0)

    # ---- global step 0 initialises the recursion (through scratch) ----------
    @pl.when(s == 0)
    def _init():
        a0 = start_ref[...] + em0                                      # (T, B)
        alpha_sc[...] = a0
        gold_sc[...] = jnp.sum(a0 * oh0, axis=0, keepdims=True)
        prev_oh_sc[...] = oh0
        last_oh_sc[...] = oh0
        mt = jnp.max(tt, axis=1, keepdims=True)                        # (T, 1)
        mt_sc[...] = mt
        # NOTE: padded "from" columns of tt are _NEG -> exp(...)=0 (no leak);
        # padded "to" rows have mt=_NEG so etr=1, harmless because padded
        # emissions are 0 and padded end scores are _NEG (keep that convention).
        etr_sc[...] = jnp.exp(tt - mt)     # stabilized exp(transitions.T)

    # ---- hoisted loop invariants (read / broadcast once per block) ----------
    etr = etr_sc[...]                                       # (T, T)
    mt_b = jnp.broadcast_to(mt_sc[...], (T, B))             # (T, B)

    # ---- recursion state carried in registers across the whole block --------
    state = (alpha_sc[...], gold_sc[...], prev_oh_sc[...], last_oh_sc[...])

    def recur(state, em, msk, oh):
        alpha, gold, prev_oh, last_oh = state
        # gold path: transitions[prev_tag, cur_tag] via one MXU matmul.
        # TODO(synk): if T_pad >= 32, cast etr and exp(alpha - ma) to bf16 at
        # the matmul boundary (keep the gold-path matmul + all elementwise f32).
        trans_row = jnp.dot(tt, prev_oh,
                            preferred_element_type=jnp.float32)       # (T, B)
        step_score = jnp.sum((trans_row + em) * oh, axis=0, keepdims=True)
        gold = gold + msk * step_score
        # forward recursion: stabilized logsumexp as one MXU matmul
        ma = jnp.max(alpha, axis=0, keepdims=True)                     # (1, B)
        z = jnp.dot(etr, jnp.exp(alpha - ma),
                    preferred_element_type=jnp.float32)                # (T, B)
        next_alpha = ma + mt_b + jnp.log(z) + em
        keep = msk > 0.0
        alpha = jnp.where(keep, next_alpha, alpha)
        last_oh = jnp.where(keep, oh, last_oh)
        return alpha, gold, oh, last_oh

    # sub-step 0: recur result is only kept when this is NOT the first grid
    # block (on s==0 the init above already consumed step 0); a scalar select
    # avoids a second scratch round-trip on every s>0 block.
    stepped = recur(state, em0, msk0, oh0)
    first = s == 0
    state = tuple(jnp.where(first, a, b) for a, b in zip(state, stepped))

    # remaining sub-steps: fully unrolled, state threaded through vregs
    for j in range(1, seq_block):
        state = recur(state, *load(j))

    alpha, gold, prev_oh, last_oh = state
    alpha_sc[...] = alpha            # single scratch writeback per block
    gold_sc[...] = gold
    prev_oh_sc[...] = prev_oh
    last_oh_sc[...] = last_oh

    # ---- last block: finish CRF, fused cross-entropies, combine --------------
    @pl.when(s == ns - 1)
    def _finalize():
        end = end_ref[...]                                             # (T, 1)
        gold_f = gold + jnp.sum(end * last_oh, axis=0, keepdims=True)
        fin = alpha + end
        mx = jnp.max(fin, axis=0, keepdims=True)
        logz = mx + jnp.log(jnp.sum(jnp.exp(fin - mx), axis=0, keepdims=True))
        bvalid = (lax.broadcasted_iota(jnp.int32, (1, B), 1) < batch
                  ).astype(jnp.float32)
        loss1 = jnp.sum((logz - gold_f) * bvalid) / batch

        loss2 = _masked_softmax_xent(elog_ref[...], elab_ref[...],
                                     n_entity, ignore_index=0)
        loss3 = _masked_softmax_xent(ilog_ref[...], ilab_ref[...],
                                     n_intent, ignore_index=None)

        out_ref[0, 0] = (loss1 + loss2 + loss3) * (1.0 / 3.0)
        out_ref[0, 1] = loss1
        out_ref[0, 2] = loss2
        out_ref[0, 3] = loss3


def loss_forward(outputs, labels, crf_params, *, seq_block=None):
    emission_score, attention_mask, entity_logit, intent_logit = outputs
    seq_labels, entity_labels, intent_labels = labels
    start_t, end_t, trans = crf_params

    B, S, T = emission_score.shape
    C2 = entity_logit.shape[-1]
    C3 = intent_logit.shape[-1]
    N2 = entity_labels.size
    N3 = intent_labels.size

    f32 = jnp.float32
    if seq_block is None:
        seq_block = min(64, S)         # fewer grid steps, longer unrolled window
    B_pad = _round_up(B, 128)          # batch / rows on the 128-lane axis
    T_pad = _round_up(T, 8)            # tags on sublanes
    S_pad = _round_up(S, seq_block)    # padded steps carry mask=0 -> no-ops
    C2_pad, N2_pad = _round_up(C2, 8), _round_up(N2, 128)
    C3_pad, N3_pad = _round_up(C3, 8), _round_up(N3, 128)

    # TODO(synk): for B > 128 on v7x, add a leading "parallel" grid axis over
    # 128-lane batch chunks so both TensorCores work on independent chunks.
    # TODO(synk): for tiny B, the true batch could be passed as the (full-dim)
    # last block dim to avoid the 128-lane padded HBM copy below.
    # --- CRF inputs: sequence-major, (tags, batch) = (sublane, lane) ----------
    em = _place(jnp.transpose(emission_score, (1, 2, 0)),
                (S_pad, T_pad, B_pad))                       # (S, T, B)
    tg = _place(jnp.transpose(seq_labels, (1, 0))[:, None, :],
                (S_pad, 1, B_pad), 0, jnp.int32)             # (S, 1, B)
    mk = _place(jnp.transpose(attention_mask, (1, 0))[:, None, :],
                (S_pad, 1, B_pad))                           # (S, 1, B)
    start_p = _place(start_t[:, None], (T_pad, 1), _NEG)
    end_p = _place(end_t[:, None], (T_pad, 1), _NEG)
    trans_tp = _place(trans.T, (T_pad, T_pad), _NEG)         # (to, from)

    # --- cross-entropy inputs: (classes, rows) = (sublane, lane) --------------
    elog = _place(entity_logit.reshape(-1, C2).T, (C2_pad, N2_pad), _NEG)
    elab = _place(entity_labels.reshape(1, -1), (1, N2_pad), 0, jnp.int32)
    ilog = _place(intent_logit.reshape(-1, C3).T, (C3_pad, N3_pad), _NEG)
    ilab = _place(intent_labels.reshape(1, -1), (1, N3_pad), 0, jnp.int32)

    kern = functools.partial(_fused_loss_kernel, batch=B, n_entity=N2,
                             n_intent=N3, seq_block=seq_block)

    def seq_spec(shp):
        return pl.BlockSpec((seq_block,) + shp[1:], lambda s: (s, 0, 0))

    def full_spec(shp):
        zeros = (0,) * len(shp)
        return pl.BlockSpec(shp, lambda s: zeros)

    out = pl.pallas_call(
        kern,
        grid=(S_pad // seq_block,),
        out_shape=jax.ShapeDtypeStruct((1, 4), f32),
        in_specs=[seq_spec(em.shape), seq_spec(tg.shape), seq_spec(mk.shape),
                  full_spec(start_p.shape), full_spec(end_p.shape),
                  full_spec(trans_tp.shape),
                  full_spec(elog.shape), full_spec(elab.shape),
                  full_spec(ilog.shape), full_spec(ilab.shape)],
        out_specs=pl.BlockSpec((1, 4), lambda s: (0, 0),
                               memory_space=pltpu.MemorySpace.SMEM),
        scratch_shapes=[
            pltpu.VMEM((T_pad, B_pad), f32),   # alpha (forward recursion)
            pltpu.VMEM((1, B_pad), f32),       # gold path score
            pltpu.VMEM((T_pad, B_pad), f32),   # one-hot(tags[i-1])
            pltpu.VMEM((T_pad, B_pad), f32),   # one-hot(last unmasked tag)
            pltpu.VMEM((T_pad, T_pad), f32),   # exp(trans.T - rowmax)
            pltpu.VMEM((T_pad, 1), f32),       # rowmax(trans.T) = colmax(trans)
        ],
        compiler_params=pltpu.CompilerParams(
            dimension_semantics=("arbitrary",)),
    )(em, tg, mk, start_p, end_p, trans_tp, elog, elab, ilog, ilab)

    return {'loss': out[0, 0], 'loss1': out[0, 1],
            'loss2': out[0, 2], 'loss3': out[0, 3]}


# ----------------------------------------------------------------------------
# Pure-JAX references (for correctness check only)
# ----------------------------------------------------------------------------
def _crf_nll_ref(emissions, mask, tags, start_t, end_t, trans):
    B, S, T = emissions.shape
    maskf = mask.astype(jnp.float32)
    ar = jnp.arange(B)
    score = start_t[tags[:, 0]] + emissions[ar, 0, tags[:, 0]]
    for i in range(1, S):
        score = score + trans[tags[:, i - 1], tags[:, i]] * maskf[:, i]
        score = score + emissions[ar, i, tags[:, i]] * maskf[:, i]
    seq_ends = mask.astype(jnp.int32).sum(1) - 1
    score = score + end_t[tags[ar, seq_ends]]
    alpha = start_t[None, :] + emissions[:, 0]
    for i in range(1, S):
        nxt = jax.nn.logsumexp(alpha[:, :, None] + trans[None, :, :]
                               + emissions[:, i][:, None, :], axis=1)
        alpha = jnp.where(maskf[:, i:i + 1] > 0, nxt, alpha)
    logz = jax.nn.logsumexp(alpha + end_t[None, :], axis=1)
    return jnp.mean(logz - score)


def _ce_ref(logits, labels, ignore_index=None):
    lse = jax.nn.logsumexp(logits, axis=-1)
    gold = jnp.take_along_axis(logits, labels[:, None], axis=-1)[:, 0]
    nll = lse - gold
    if ignore_index is None:
        return jnp.mean(nll)
    valid = (labels != ignore_index).astype(jnp.float32)
    return jnp.sum(nll * valid) / jnp.sum(valid)


if __name__ == "__main__":
    key = jax.random.PRNGKey(0)
    B, S, T = 2, 8, 4            # batch, seq_len, len(entity_categories) (CRF tags)
    C2, C3, E = T + 1, 6, 3      # entity classes, intent classes, entities/sample
    ks = jax.random.split(key, 9)

    emission_score = jax.random.normal(ks[0], (B, S, T), jnp.float32)
    lengths = jnp.array([S, 5], jnp.int32)
    attention_mask = jnp.arange(S)[None, :] < lengths[:, None]           # bool
    seq_labels = jax.random.randint(ks[1], (B, S), 0, T)
    seq_labels = jnp.where(attention_mask, seq_labels, 0)

    entity_logit = jax.random.normal(ks[2], (B, E, C2), jnp.float32)
    entity_labels = jax.random.randint(ks[3], (B, E), 0, C2)
    entity_labels = entity_labels.at[0, 0].set(1)   # ensure >=1 non-ignored label

    intent_logit = jax.random.normal(ks[4], (B, C3), jnp.float32)
    intent_labels = jax.random.randint(ks[5], (B,), 0, C3)

    # deterministic CRF parameters (model.crf): start/end/transition scores
    start_t = jax.random.uniform(ks[6], (T,), jnp.float32, -0.1, 0.1)
    end_t = jax.random.uniform(ks[7], (T,), jnp.float32, -0.1, 0.1)
    trans = jax.random.uniform(ks[8], (T, T), jnp.float32, -0.1, 0.1)

    outputs = (emission_score, attention_mask, entity_logit, intent_logit)
    labels = (seq_labels, entity_labels, intent_labels)
    result = loss_forward(outputs, labels, (start_t, end_t, trans))
    result = jax.tree_util.tree_map(jax.block_until_ready, result)

    # correctness check against pure-JAX reference
    ref1 = _crf_nll_ref(emission_score, attention_mask, seq_labels,
                        start_t, end_t, trans)
    ref2 = _ce_ref(entity_logit.reshape(-1, C2), entity_labels.reshape(-1),
                   ignore_index=0)
    ref3 = _ce_ref(intent_logit.reshape(-1, C3), intent_labels.reshape(-1))
    ref_total = (ref1 + ref2 + ref3) / 3
    assert jnp.allclose(result['loss1'], ref1, rtol=1e-3, atol=1e-3)
    assert jnp.allclose(result['loss2'], ref2, rtol=1e-3, atol=1e-3)
    assert jnp.allclose(result['loss3'], ref3, rtol=1e-3, atol=1e-3)
    assert jnp.allclose(result['loss'], ref_total, rtol=1e-3, atol=1e-3)

    print("KERNEL_OK")
</pallas_src>

<mosaic_0001>
module attributes {stable_mosaic.version = 11 : i64} {
  func.func @_fused_loss_kernel(%arg0: i32, %arg1: memref<8x8x128xf32, #tpu.memory_space<vmem>>, %arg2: memref<8x1x128xi32, #tpu.memory_space<vmem>>, %arg3: memref<8x1x128xf32, #tpu.memory_space<vmem>>, %arg4: memref<8x1xf32, #tpu.memory_space<vmem>>, %arg5: memref<8x1xf32, #tpu.memory_space<vmem>>, %arg6: memref<8x8xf32, #tpu.memory_space<vmem>>, %arg7: memref<8x128xf32, #tpu.memory_space<vmem>>, %arg8: memref<1x128xi32, #tpu.memory_space<vmem>>, %arg9: memref<8x128xf32, #tpu.memory_space<vmem>>, %arg10: memref<1x128xi32, #tpu.memory_space<vmem>>, %arg11: memref<1x4xf32, #tpu.memory_space<smem>>, %arg12: memref<8x128xf32, #tpu.memory_space<vmem>>, %arg13: memref<1x128xf32, #tpu.memory_space<vmem>>, %arg14: memref<8x128xf32, #tpu.memory_space<vmem>>, %arg15: memref<8x128xf32, #tpu.memory_space<vmem>>, %arg16: memref<8x8xf32, #tpu.memory_space<vmem>>, %arg17: memref<8x1xf32, #tpu.memory_space<vmem>>) attributes {dimension_semantics = [#tpu.dimension_semantics<arbitrary>], iteration_bounds = array<i64: 1>, scalar_prefetch = 0 : i64, scratch_operands = 6 : i64, tpu.core_type = #tpu.core_type<tc>, window_params = [{transform_indices = @transform_0, window_bounds = array<i64: 8, 8, 128>}, {transform_indices = @transform_1, window_bounds = array<i64: 8, 1, 128>}, {transform_indices = @transform_2, window_bounds = array<i64: 8, 1, 128>}, {pipeline_mode = #tpu.pipeline_mode<synchronous>, transform_indices = @transform_3, window_bounds = array<i64: 8, 1>}, {pipeline_mode = #tpu.pipeline_mode<synchronous>, transform_indices = @transform_4, window_bounds = array<i64: 8, 1>}, {pipeline_mode = #tpu.pipeline_mode<synchronous>, transform_indices = @transform_5, window_bounds = array<i64: 8, 8>}, {pipeline_mode = #tpu.pipeline_mode<synchronous>, transform_indices = @transform_6, window_bounds = array<i64: 8, 128>}, {pipeline_mode = #tpu.pipeline_mode<synchronous>, transform_indices = @transform_7, window_bounds = array<i64: 1, 128>}, {pipeline_mode = #tpu.pipeline_mode<synchronous>, transform_indices = @transform_8, window_bounds = array<i64: 8, 128>}, {pipeline_mode = #tpu.pipeline_mode<synchronous>, transform_indices = @transform_9, window_bounds = array<i64: 1, 128>}, {transform_indices = @transform_10, window_bounds = array<i64: 1, 4>}]} {
    %0 = tpu.iota {dimensions = array<i32: 0>} : vector<8x128xi32>
    %c0 = arith.constant 0 : index
    %c0_0 = arith.constant 0 : index
    %1 = vector.load %arg6[%c0, %c0_0] : memref<8x8xf32, #tpu.memory_space<vmem>>, vector<8x8xf32>
    %c0_1 = arith.constant 0 : index
    %c0_2 = arith.constant 0 : index
    %c0_3 = arith.constant 0 : index
    %2 = vector.load %arg1[%c0_1, %c0_2, %c0_3] : memref<8x8x128xf32, #tpu.memory_space<vmem>>, vector<1x8x128xf32>
    %3 = vector.shape_cast %2 : vector<1x8x128xf32> to vector<8x128xf32>
    %c0_4 = arith.constant 0 : index
    %c0_5 = arith.constant 0 : index
    %c0_6 = arith.constant 0 : index
    %4 = vector.load %arg2[%c0_4, %c0_5, %c0_6] : memref<8x1x128xi32, #tpu.memory_space<vmem>>, vector<1x1x128xi32>
    %5 = vector.shape_cast %4 : vector<1x1x128xi32> to vector<1x128xi32>
    %6 = vector.broadcast %5 : vector<1x128xi32> to vector<8x128xi32>
    %7 = arith.cmpi eq, %0, %6 : vector<8x128xi32>
    %8 = arith.extui %7 : vector<8x128xi1> to vector<8x128xi32>
    %9 = arith.sitofp %8 : vector<8x128xi32> to vector<8x128xf32>
    %c0_7 = arith.constant 0 : index
    %c0_8 = arith.constant 0 : index
    %c0_9 = arith.constant 0 : index
    %10 = vector.load %arg3[%c0_7, %c0_8, %c0_9] : memref<8x1x128xf32, #tpu.memory_space<vmem>>, vector<1x1x128xf32>
    %11 = vector.shape_cast %10 : vector<1x1x128xf32> to vector<1x128xf32>
    %c0_i32 = arith.constant 0 : i32
    %12 = arith.cmpi eq, %arg0, %c0_i32 : i32
    %13 = arith.extui %12 : i1 to i32
    %c0_i32_10 = arith.constant 0 : i32
    %14 = arith.cmpi ne, %13, %c0_i32_10 : i32
    scf.if %14 {
      %c0_129 = arith.constant 0 : index
      %c0_130 = arith.constant 0 : index
      %313 = vector.load %arg4[%c0_129, %c0_130] : memref<8x1xf32, #tpu.memory_space<vmem>>, vector<8x1xf32>
      %314 = vector.broadcast %313 : vector<8x1xf32> to vector<8x128xf32>
      %315 = arith.addf %314, %3 : vector<8x128xf32>
      %c0_131 = arith.constant 0 : index
      %c0_132 = arith.constant 0 : index
      %316 = vector.load %arg12[%c0_131, %c0_132] : memref<8x128xf32, #tpu.memory_space<vmem>>, vector<8x128xf32>
      tpu.vector_store %arg12[%c0_131, %c0_132], %315 {strides = array<i32>} : memref<8x128xf32, #tpu.memory_space<vmem>>, vector<8x128xf32>,
      %317 = arith.mulf %315, %9 : vector<8x128xf32>
      %cst_133 = arith.constant dense<0.000000e+00> : vector<128xf32>
      %318 = vector.multi_reduction <add>, %317, %cst_133 [0] : vector<8x128xf32> to vector<128xf32>
      %319 = vector.shape_cast %318 : vector<128xf32> to vector<1x128xf32>
      %c0_134 = arith.constant 0 : index
      %c0_135 = arith.constant 0 : index
      %320 = vector.load %arg13[%c0_134, %c0_135] : memref<1x128xf32, #tpu.memory_space<vmem>>, vector<1x128xf32>
      tpu.vector_store %arg13[%c0_134, %c0_135], %319 {strides = array<i32>} : memref<1x128xf32, #tpu.memory_space<vmem>>, vector<1x128xf32>,
      %c0_136 = arith.constant 0 : index
      %c0_137 = arith.constant 0 : index
      %321 = vector.load %arg14[%c0_136, %c0_137] : memref<8x128xf32, #tpu.memory_space<vmem>>, vector<8x128xf32>
      tpu.vector_store %arg14[%c0_136, %c0_137], %9 {strides = array<i32>} : memref<8x128xf32, #tpu.memory_space<vmem>>, vector<8x128xf32>,
      %c0_138 = arith.constant 0 : index
      %c0_139 = arith.constant 0 : index
      %322 = vector.load %arg15[%c0_138, %c0_139] : memref<8x128xf32, #tpu.memory_space<vmem>>, vector<8x128xf32>
      tpu.vector_store %arg15[%c0_138, %c0_139], %9 {strides = array<i32>} : memref<8x128xf32, #tpu.memory_space<vmem>>, vector<8x128xf32>,
      %cst_140 = arith.constant dense<0xFF800000> : vector<8xf32>
      %323 = vector.multi_reduction <maximumf>, %1, %cst_140 [1] : vector<8x8xf32> to vector<8xf32>
      %324 = vector.shape_cast %323 : vector<8xf32> to vector<8x1xf32>
      %c0_141 = arith.constant 0 : index
      %c0_142 = arith.constant 0 : index
      %325 = vector.load %arg17[%c0_141, %c0_142] : memref<8x1xf32, #tpu.memory_space<vmem>>, vector<8x1xf32>
      tpu.vector_store %arg17[%c0_141, %c0_142], %324 {strides = array<i32>} : memref<8x1xf32, #tpu.memory_space<vmem>>, vector<8x1xf32>,
      %326 = vector.broadcast %324 : vector<8x1xf32> to vector<8x8xf32>
      %327 = arith.subf %1, %326 : vector<8x8xf32>
      %328 = math.exp %327 : vector<8x8xf32>
      %c0_143 = arith.constant 0 : index
      %c0_144 = arith.constant 0 : index
      %329 = vector.load %arg16[%c0_143, %c0_144] : memref<8x8xf32, #tpu.memory_space<vmem>>, vector<8x8xf32>
      tpu.vector_store %arg16[%c0_143, %c0_144], %328 {strides = array<i32>} : memref<8x8xf32, #tpu.memory_space<vmem>>, vector<8x8xf32>,
    } else {
    }
    %c0_11 = arith.constant 0 : index
    %c0_12 = arith.constant 0 : index
    %15 = vector.load %arg16[%c0_11, %c0_12] : memref<8x8xf32, #tpu.memory_space<vmem>>, vector<8x8xf32>
    %c0_13 = arith.constant 0 : index
    %c0_14 = arith.constant 0 : index
    %16 = vector.load %arg17[%c0_13, %c0_14] : memref<8x1xf32, #tpu.memory_space<vmem>>, vector<8x1xf32>
    %17 = vector.shape_cast %16 : vector<8x1xf32> to vector<8x1xf32>
    %18 = vector.broadcast %17 : vector<8x1xf32> to vector<8x128xf32>
    %c0_15 = arith.constant 0 : index
    %c0_16 = arith.constant 0 : index
    %19 = vector.load %arg12[%c0_15, %c0_16] : memref<8x128xf32, #tpu.memory_space<vmem>>, vector<8x128xf32>
    %c0_17 = arith.constant 0 : index
    %c0_18 = arith.constant 0 : index
    %20 = vector.load %arg13[%c0_17, %c0_18] : memref<1x128xf32, #tpu.memory_space<vmem>>, vector<1x128xf32>
    %c0_19 = arith.constant 0 : index
    %c0_20 = arith.constant 0 : index
    %21 = vector.load %arg14[%c0_19, %c0_20] : memref<8x128xf32, #tpu.memory_space<vmem>>, vector<8x128xf32>
    %c0_21 = arith.constant 0 : index
    %c0_22 = arith.constant 0 : index
    %22 = vector.load %arg15[%c0_21, %c0_22] : memref<8x128xf32, #tpu.memory_space<vmem>>, vector<8x128xf32>
    %cst = arith.constant dense<0.000000e+00> : vector<8x128xf32>
    %23 = tpu.matmul %1, %21, %cst {dimension_numbers = #tpu.dot_dimension_numbers<[1], [0], [0], [1], [0, 0, 1, 1], [], []>} : vector<8x8xf32>, vector<8x128xf32>, vector<8x128xf32> -> vector<8x128xf32>
    %24 = arith.addf %23, %3 : vector<8x128xf32>
    %25 = arith.mulf %24, %9 : vector<8x128xf32>
    %cst_23 = arith.constant dense<0.000000e+00> : vector<128xf32>
    %26 = vector.multi_reduction <add>, %25, %cst_23 [0] : vector<8x128xf32> to vector<128xf32>
    %27 = vector.shape_cast %26 : vector<128xf32> to vector<1x128xf32>
    %28 = arith.mulf %11, %27 : vector<1x128xf32>
    %29 = arith.addf %20, %28 : vector<1x128xf32>
    %cst_24 = arith.constant dense<0xFF800000> : vector<128xf32>
    %30 = vector.multi_reduction <maximumf>, %19, %cst_24 [0] : vector<8x128xf32> to vector<128xf32>
    %31 = vector.shape_cast %30 : vector<128xf32> to vector<1x128xf32>
    %32 = vector.broadcast %31 : vector<1x128xf32> to vector<8x128xf32>
    %33 = arith.subf %19, %32 : vector<8x128xf32>
    %34 = math.exp %33 : vector<8x128xf32>
    %cst_25 = arith.constant dense<0.000000e+00> : vector<8x128xf32>
    %35 = tpu.matmul %15, %34, %cst_25 {dimension_numbers = #tpu.dot_dimension_numbers<[1], [0], [0], [1], [0, 0, 1, 1], [], []>} : vector<8x8xf32>, vector<8x128xf32>, vector<8x128xf32> -> vector<8x128xf32>
    %36 = vector.broadcast %31 : vector<1x128xf32> to vector<8x128xf32>
    %37 = arith.addf %36, %18 : vector<8x128xf32>
    %38 = math.log %35 : vector<8x128xf32>
    %39 = arith.addf %37, %38 : vector<8x128xf32>
    %40 = arith.addf %39, %3 : vector<8x128xf32>
    %cst_26 = arith.constant 0.000000e+00 : f32
    %41 = vector.broadcast %cst_26 : f32 to vector<1x128xf32>
    %42 = arith.cmpf ogt, %11, %41 : vector<1x128xf32>
    %43 = vector.shape_cast %42 : vector<1x128xi1> to vector<1x128xi1>
    %44 = vector.broadcast %43 : vector<1x128xi1> to vector<8x128xi1>
    %45 = arith.select %44, %40, %19 : vector<8x128xi1>, vector<8x128xf32>
    %46 = vector.shape_cast %42 : vector<1x128xi1> to vector<1x128xi1>
    %47 = vector.broadcast %46 : vector<1x128xi1> to vector<8x128xi1>
    %48 = arith.select %47, %9, %22 : vector<8x128xi1>, vector<8x128xf32>
    %c0_i32_27 = arith.constant 0 : i32
    %49 = arith.cmpi eq, %arg0, %c0_i32_27 : i32
    %50 = arith.select %49, %19, %45 : vector<8x128xf32>
    %51 = arith.select %49, %20, %29 : vector<1x128xf32>
    %52 = arith.select %49, %21, %9 : vector<8x128xf32>
    %53 = arith.select %49, %22, %48 : vector<8x128xf32>
    %c1 = arith.constant 1 : index
    %c0_28 = arith.constant 0 : index
    %c0_29 = arith.constant 0 : index
    %54 = vector.load %arg1[%c1, %c0_28, %c0_29] : memref<8x8x128xf32, #tpu.memory_space<vmem>>, vector<1x8x128xf32>
    %55 = vector.shape_cast %54 : vector<1x8x128xf32> to vector<8x128xf32>
    %c1_30 = arith.constant 1 : index
    %c0_31 = arith.constant 0 : index
    %c0_32 = arith.constant 0 : index
    %56 = vector.load %arg2[%c1_30, %c0_31, %c0_32] : memref<8x1x128xi32, #tpu.memory_space<vmem>>, vector<1x1x128xi32>
    %57 = vector.shape_cast %56 : vector<1x1x128xi32> to vector<1x128xi32>
    %58 = vector.broadcast %57 : vector<1x128xi32> to vector<8x128xi32>
    %59 = arith.cmpi eq, %0, %58 : vector<8x128xi32>
    %60 = arith.extui %59 : vector<8x128xi1> to vector<8x128xi32>
    %61 = arith.sitofp %60 : vector<8x128xi32> to vector<8x128xf32>
    %c1_33 = arith.constant 1 : index
    %c0_34 = arith.constant 0 : index
    %c0_35 = arith.constant 0 : index
    %62 = vector.load %arg3[%c1_33, %c0_34, %c0_35] : memref<8x1x128xf32, #tpu.memory_space<vmem>>, vector<1x1x128xf32>
    %63 = vector.shape_cast %62 : vector<1x1x128xf32> to vector<1x128xf32>
    %cst_36 = arith.constant dense<0.000000e+00> : vector<8x128xf32>
    %64 = tpu.matmul %1, %52, %cst_36 {dimension_numbers = #tpu.dot_dimension_numbers<[1], [0], [0], [1], [0, 0, 1, 1], [], []>} : vector<8x8xf32>, vector<8x128xf32>, vector<8x128xf32> -> vector<8x128xf32>
    %65 = arith.addf %64, %55 : vector<8x128xf32>
    %66 = arith.mulf %65, %61 : vector<8x128xf32>
    %cst_37 = arith.constant dense<0.000000e+00> : vector<128xf32>
    %67 = vector.multi_reduction <add>, %66, %cst_37 [0] : vector<8x128xf32> to vector<128xf32>
    %68 = vector.shape_cast %67 : vector<128xf32> to vector<1x128xf32>
    %69 = arith.mulf %63, %68 : vector<1x128xf32>
    %70 = arith.addf %51, %69 : vector<1x128xf32>
    %cst_38 = arith.constant dense<0xFF800000> : vector<128xf32>
    %71 = vector.multi_reduction <maximumf>, %50, %cst_38 [0] : vector<8x128xf32> to vector<128xf32>
    %72 = vector.shape_cast %71 : vector<128xf32> to vector<1x128xf32>
    %73 = vector.broadcast %72 : vector<1x128xf32> to vector<8x128xf32>
    %74 = arith.subf %50, %73 : vector<8x128xf32>
    %75 = math.exp %74 : vector<8x128xf32>
    %cst_39 = arith.constant dense<0.000000e+00> : vector<8x128xf32>
    %76 = tpu.matmul %15, %75, %cst_39 {dimension_numbers = #tpu.dot_dimension_numbers<[1], [0], [0], [1], [0, 0, 1, 1], [], []>} : vector<8x8xf32>, vector<8x128xf32>, vector<8x128xf32> -> vector<8x128xf32>
    %77 = vector.broadcast %72 : vector<1x128xf32> to vector<8x128xf32>
    %78 = arith.addf %77, %18 : vector<8x128xf32>
    %79 = math.log %76 : vector<8x128xf32>
    %80 = arith.addf %78, %79 : vector<8x128xf32>
    %81 = arith.addf %80, %55 : vector<8x128xf32>
    %cst_40 = arith.constant 0.000000e+00 : f32
    %82 = vector.broadcast %cst_40 : f32 to vector<1x128xf32>
    %83 = arith.cmpf ogt, %63, %82 : vector<1x128xf32>
    %84 = vector.shape_cast %83 : vector<1x128xi1> to vector<1x128xi1>
    %85 = vector.broadcast %84 : vector<1x128xi1> to vector<8x128xi1>
    %86 = arith.select %85, %81, %50 : vector<8x128xi1>, vector<8x128xf32>
    %87 = vector.shape_cast %83 : vector<1x128xi1> to vector<1x128xi1>
    %88 = vector.broadcast %87 : vector<1x128xi1> to vector<8x128xi1>
    %89 = arith.select %88, %61, %53 : vector<8x128xi1>, vector<8x128xf32>
    %c2 = arith.constant 2 : index
    %c0_41 = arith.constant 0 : index
    %c0_42 = arith.constant 0 : index
    %90 = vector.load %arg1[%c2, %c0_41, %c0_42] : memref<8x8x128xf32, #tpu.memory_space<vmem>>, vector<1x8x128xf32>
    %91 = vector.shape_cast %90 : vector<1x8x128xf32> to vector<8x128xf32>
    %c2_43 = arith.constant 2 : index
    %c0_44 = arith.constant 0 : index
    %c0_45 = arith.constant 0 : index
    %92 = vector.load %arg2[%c2_43, %c0_44, %c0_45] : memref<8x1x128xi32, #tpu.memory_space<vmem>>, vector<1x1x128xi32>
    %93 = vector.shape_cast %92 : vector<1x1x128xi32> to vector<1x128xi32>
    %94 = vector.broadcast %93 : vector<1x128xi32> to vector<8x128xi32>
    %95 = arith.cmpi eq, %0, %94 : vector<8x128xi32>
    %96 = arith.extui %95 : vector<8x128xi1> to vector<8x128xi32>
    %97 = arith.sitofp %96 : vector<8x128xi32> to vector<8x128xf32>
    %c2_46 = arith.constant 2 : index
    %c0_47 = arith.constant 0 : index
    %c0_48 = arith.constant 0 : index
    %98 = vector.load %arg3[%c2_46, %c0_47, %c0_48] : memref<8x1x128xf32, #tpu.memory_space<vmem>>, vector<1x1x128xf32>
    %99 = vector.shape_cast %98 : vector<1x1x128xf32> to vector<1x128xf32>
    %cst_49 = arith.constant dense<0.000000e+00> : vector<8x128xf32>
    %100 = tpu.matmul %1, %61, %cst_49 {dimension_numbers = #tpu.dot_dimension_numbers<[1], [0], [0], [1], [0, 0, 1, 1], [], []>} : vector<8x8xf32>, vector<8x128xf32>, vector<8x128xf32> -> vector<8x128xf32>
    %101 = arith.addf %100, %91 : vector<8x128xf32>
    %102 = arith.mulf %101, %97 : vector<8x128xf32>
    %cst_50 = arith.constant dense<0.000000e+00> : vector<128xf32>
    %103 = vector.multi_reduction <add>, %102, %cst_50 [0] : vector<8x128xf32> to vector<128xf32>
    %104 = vector.shape_cast %103 : vector<128xf32> to vector<1x128xf32>
    %105 = arith.mulf %99, %104 : vector<1x128xf32>
    %106 = arith.addf %70, %105 : vector<1x128xf32>
    %cst_51 = arith.constant dense<0xFF800000> : vector<128xf32>
    %107 = vector.multi_reduction <maximumf>, %86, %cst_51 [0] : vector<8x128xf32> to vector<128xf32>
    %108 = vector.shape_cast %107 : vector<128xf32> to vector<1x128xf32>
    %109 = vector.broadcast %108 : vector<1x128xf32> to vector<8x128xf32>
    %110 = arith.subf %86, %109 : vector<8x128xf32>
    %111 = math.exp %110 : vector<8x128xf32>
    %cst_52 = arith.constant dense<0.000000e+00> : vector<8x128xf32>
    %112 = tpu.matmul %15, %111, %cst_52 {dimension_numbers = #tpu.dot_dimension_numbers<[1], [0], [0], [1], [0, 0, 1, 1], [], []>} : vector<8x8xf32>, vector<8x128xf32>, vector<8x128xf32> -> vector<8x128xf32>
    %113 = vector.broadcast %108 : vector<1x128xf32> to vector<8x128xf32>
    %114 = arith.addf %113, %18 : vector<8x128xf32>
    %115 = math.log %112 : vector<8x128xf32>
    %116 = arith.addf %114, %115 : vector<8x128xf32>
    %117 = arith.addf %116, %91 : vector<8x128xf32>
    %cst_53 = arith.constant 0.000000e+00 : f32
    %118 = vector.broadcast %cst_53 : f32 to vector<1x128xf32>
    %119 = arith.cmpf ogt, %99, %118 : vector<1x128xf32>
    %120 = vector.shape_cast %119 : vector<1x128xi1> to vector<1x128xi1>
    %121 = vector.broadcast %120 : vector<1x128xi1> to vector<8x128xi1>
    %122 = arith.select %121, %117, %86 : vector<8x128xi1>, vector<8x128xf32>
    %123 = vector.shape_cast %119 : vector<1x128xi1> to vector<1x128xi1>
    %124 = vector.broadcast %123 : vector<1x128xi1> to vector<8x128xi1>
    %125 = arith.select %124, %97, %89 : vector<8x128xi1>, vector<8x128xf32>
    %c3 = arith.constant 3 : index
    %c0_54 = arith.constant 0 : index
    %c0_55 = arith.constant 0 : index
    %126 = vector.load %arg1[%c3, %c0_54, %c0_55] : memref<8x8x128xf32, #tpu.memory_space<vmem>>, vector<1x8x128xf32>
    %127 = vector.shape_cast %126 : vector<1x8x128xf32> to vector<8x128xf32>
    %c3_56 = arith.constant 3 : index
    %c0_57 = arith.constant 0 : index
    %c0_58 = arith.constant 0 : index
    %128 = vector.load %arg2[%c3_56, %c0_57, %c0_58] : memref<8x1x128xi32, #tpu.memory_space<vmem>>, vector<1x1x128xi32>
    %129 = vector.shape_cast %128 : vector<1x1x128xi32> to vector<1x128xi32>
    %130 = vector.broadcast %129 : vector<1x128xi32> to vector<8x128xi32>
    %131 = arith.cmpi eq, %0, %130 : vector<8x128xi32>
    %132 = arith.extui %131 : vector<8x128xi1> to vector<8x128xi32>
    %133 = arith.sitofp %132 : vector<8x128xi32> to vector<8x128xf32>
    %c3_59 = arith.constant 3 : index
    %c0_60 = arith.constant 0 : index
    %c0_61 = arith.constant 0 : index
    %134 = vector.load %arg3[%c3_59, %c0_60, %c0_61] : memref<8x1x128xf32, #tpu.memory_space<vmem>>, vector<1x1x128xf32>
    %135 = vector.shape_cast %134 : vector<1x1x128xf32> to vector<1x128xf32>
    %cst_62 = arith.constant dense<0.000000e+00> : vector<8x128xf32>
    %136 = tpu.matmul %1, %97, %cst_62 {dimension_numbers = #tpu.dot_dimension_numbers<[1], [0], [0], [1], [0, 0, 1, 1], [], []>} : vector<8x8xf32>, vector<8x128xf32>, vector<8x128xf32> -> vector<8x128xf32>
    %137 = arith.addf %136, %127 : vector<8x128xf32>
    %138 = arith.mulf %137, %133 : vector<8x128xf32>
    %cst_63 = arith.constant dense<0.000000e+00> : vector<128xf32>
    %139 = vector.multi_reduction <add>, %138, %cst_63 [0] : vector<8x128xf32> to vector<128xf32>
    %140 = vector.shape_cast %139 : vector<128xf32> to vector<1x128xf32>
    %141 = arith.mulf %135, %140 : vector<1x128xf32>
    %142 = arith.addf %106, %141 : vector<1x128xf32>
    %cst_64 = arith.constant dense<0xFF800000> : vector<128xf32>
    %143 = vector.multi_reduction <maximumf>, %122, %cst_64 [0] : vector<8x128xf32> to vector<128xf32>
    %144 = vector.shape_cast %143 : vector<128xf32> to vector<1x128xf32>
    %145 = vector.broadcast %144 : vector<1x128xf32> to vector<8x128xf32>
    %146 = arith.subf %122, %145 : vector<8x128xf32>
    %147 = math.exp %146 : vector<8x128xf32>
    %cst_65 = arith.constant dense<0.000000e+00> : vector<8x128xf32>
    %148 = tpu.matmul %15, %147, %cst_65 {dimension_numbers = #tpu.dot_dimension_numbers<[1], [0], [0], [1], [0, 0, 1, 1], [], []>} : vector<8x8xf32>, vector<8x128xf32>, vector<8x128xf32> -> vector<8x128xf32>
    %149 = vector.broadcast %144 : vector<1x128xf32> to vector<8x128xf32>
    %150 = arith.addf %149, %18 : vector<8x128xf32>
    %151 = math.log %148 : vector<8x128xf32>
    %152 = arith.addf %150, %151 : vector<8x128xf32>
    %153 = arith.addf %152, %127 : vector<8x128xf32>
    %cst_66 = arith.constant 0.000000e+00 : f32
    %154 = vector.broadcast %cst_66 : f32 to vector<1x128xf32>
    %155 = arith.cmpf ogt, %135, %154 : vector<1x128xf32>
    %156 = vector.shape_cast %155 : vector<1x128xi1> to vector<1x128xi1>
    %157 = vector.broadcast %156 : vector<1x128xi1> to vector<8x128xi1>
    %158 = arith.select %157, %153, %122 : vector<8x128xi1>, vector<8x128xf32>
    %159 = vector.shape_cast %155 : vector<1x128xi1> to vector<1x128xi1>
    %160 = vector.broadcast %159 : vector<1x128xi1> to vector<8x128xi1>
    %161 = arith.select %160, %133, %125 : vector<8x128xi1>, vector<8x128xf32>
    %c4 = arith.constant 4 : index
    %c0_67 = arith.constant 0 : index
    %c0_68 = arith.constant 0 : index
    %162 = vector.load %arg1[%c4, %c0_67, %c0_68] : memref<8x8x128xf32, #tpu.memory_space<vmem>>, vector<1x8x128xf32>
    %163 = vector.shape_cast %162 : vector<1x8x128xf32> to vector<8x128xf32>
    %c4_69 = arith.constant 4 : index
    %c0_70 = arith.constant 0 : index
    %c0_71 = arith.constant 0 : index
    %164 = vector.load %arg2[%c4_69, %c0_70, %c0_71] : memref<8x1x128xi32, #tpu.memory_space<vmem>>, vector<1x1x128xi32>
    %165 = vector.shape_cast %164 : vector<1x1x128xi32> to vector<1x128xi32>
    %166 = vector.broadcast %165 : vector<1x128xi32> to vector<8x128xi32>
    %167 = arith.cmpi eq, %0, %166 : vector<8x128xi32>
    %168 = arith.extui %167 : vector<8x128xi1> to vector<8x128xi32>
    %169 = arith.sitofp %168 : vector<8x128xi32> to vector<8x128xf32>
    %c4_72 = arith.constant 4 : index
    %c0_73 = arith.constant 0 : index
    %c0_74 = arith.constant 0 : index
    %170 = vector.load %arg3[%c4_72, %c0_73, %c0_74] : memref<8x1x128xf32, #tpu.memory_space<vmem>>, vector<1x1x128xf32>
    %171 = vector.shape_cast %170 : vector<1x1x128xf32> to vector<1x128xf32>
    %cst_75 = arith.constant dense<0.000000e+00> : vector<8x128xf32>
    %172 = tpu.matmul %1, %133, %cst_75 {dimension_numbers = #tpu.dot_dimension_numbers<[1], [0], [0], [1], [0, 0, 1, 1], [], []>} : vector<8x8xf32>, vector<8x128xf32>, vector<8x128xf32> -> vector<8x128xf32>
    %173 = arith.addf %172, %163 : vector<8x128xf32>
    %174 = arith.mulf %173, %169 : vector<8x128xf32>
    %cst_76 = arith.constant dense<0.000000e+00> : vector<128xf32>
    %175 = vector.multi_reduction <add>, %174, %cst_76 [0] : vector<8x128xf32> to vector<128xf32>
    %176 = vector.shape_cast %175 : vector<128xf32> to vector<1x128xf32>
    %177 = arith.mulf %171, %176 : vector<1x128xf32>
    %178 = arith.addf %142, %177 : vector<1x128xf32>
    %cst_77 = arith.constant dense<0xFF800000> : vector<128xf32>
    %179 = vector.multi_reduction <maximumf>, %158, %cst_77 [0] : vector<8x128xf32> to vector<128xf32>
    %180 = vector.shape_cast %179 : vector<128xf32> to vector<1x128xf32>
    %181 = vector.broadcast %180 : vector<1x128xf32> to vector<8x128xf32>
    %182 = arith.subf %158, %181 : vector<8x128xf32>
    %183 = math.exp %182 : vector<8x128xf32>
    %cst_78 = arith.constant dense<0.000000e+00> : vector<8x128xf32>
    %184 = tpu.matmul %15, %183, %cst_78 {dimension_numbers = #tpu.dot_dimension_numbers<[1], [0], [0], [1], [0, 0, 1, 1], [], []>} : vector<8x8xf32>, vector<8x128xf32>, vector<8x128xf32> -> vector<8x128xf32>
    %185 = vector.broadcast %180 : vector<1x128xf32> to vector<8x128xf32>
    %186 = arith.addf %185, %18 : vector<8x128xf32>
    %187 = math.log %184 : vector<8x128xf32>
    %188 = arith.addf %186, %187 : vector<8x128xf32>
    %189 = arith.addf %188, %163 : vector<8x128xf32>
    %cst_79 = arith.constant 0.000000e+00 : f32
    %190 = vector.broadcast %cst_79 : f32 to vector<1x128xf32>
    %191 = arith.cmpf ogt, %171, %190 : vector<1x128xf32>
    %192 = vector.shape_cast %191 : vector<1x128xi1> to vector<1x128xi1>
    %193 = vector.broadcast %192 : vector<1x128xi1> to vector<8x128xi1>
    %194 = arith.select %193, %189, %158 : vector<8x128xi1>, vector<8x128xf32>
    %195 = vector.shape_cast %191 : vector<1x128xi1> to vector<1x128xi1>
    %196 = vector.broadcast %195 : vector<1x128xi1> to vector<8x128xi1>
    %197 = arith.select %196, %169, %161 : vector<8x128xi1>, vector<8x128xf32>
    %c5 = arith.constant 5 : index
    %c0_80 = arith.constant 0 : index
    %c0_81 = arith.constant 0 : index
    %198 = vector.load %arg1[%c5, %c0_80, %c0_81] : memref<8x8x128xf32, #tpu.memory_space<vmem>>, vector<1x8x128xf32>
    %199 = vector.shape_cast %198 : vector<1x8x128xf32> to vector<8x128xf32>
    %c5_82 = arith.constant 5 : index
    %c0_83 = arith.constant 0 : index
    %c0_84 = arith.constant 0 : index
    %200 = vector.load %arg2[%c5_82, %c0_83, %c0_84] : memref<8x1x128xi32, #tpu.memory_space<vmem>>, vector<1x1x128xi32>
    %201 = vector.shape_cast %200 : vector<1x1x128xi32> to vector<1x128xi32>
    %202 = vector.broadcast %201 : vector<1x128xi32> to vector<8x128xi32>
    %203 = arith.cmpi eq, %0, %202 : vector<8x128xi32>
    %204 = arith.extui %203 : vector<8x128xi1> to vector<8x128xi32>
    %205 = arith.sitofp %204 : vector<8x128xi32> to vector<8x128xf32>
    %c5_85 = arith.constant 5 : index
    %c0_86 = arith.constant 0 : index
    %c0_87 = arith.constant 0 : index
    %206 = vector.load %arg3[%c5_85, %c0_86, %c0_87] : memref<8x1x128xf32, #tpu.memory_space<vmem>>, vector<1x1x128xf32>
    %207 = vector.shape_cast %206 : vector<1x1x128xf32> to vector<1x128xf32>
    %cst_88 = arith.constant dense<0.000000e+00> : vector<8x128xf32>
    %208 = tpu.matmul %1, %169, %cst_88 {dimension_numbers = #tpu.dot_dimension_numbers<[1], [0], [0], [1], [0, 0, 1, 1], [], []>} : vector<8x8xf32>, vector<8x128xf32>, vector<8x128xf32> -> vector<8x128xf32>
    %209 = arith.addf %208, %199 : vector<8x128xf32>
    %210 = arith.mulf %209, %205 : vector<8x128xf32>
    %cst_89 = arith.constant dense<0.000000e+00> : vector<128xf32>
    %211 = vector.multi_reduction <add>, %210, %cst_89 [0] : vector<8x128xf32> to vector<128xf32>
    %212 = vector.shape_cast %211 : vector<128xf32> to vector<1x128xf32>
    %213 = arith.mulf %207, %212 : vector<1x128xf32>
    %214 = arith.addf %178, %213 : vector<1x128xf32>
    %cst_90 = arith.constant dense<0xFF800000> : vector<128xf32>
    %215 = vector.multi_reduction <maximumf>, %194, %cst_90 [0] : vector<8x128xf32> to vector<128xf32>
    %216 = vector.shape_cast %215 : vector<128xf32> to vector<1x128xf32>
    %217 = vector.broadcast %216 : vector<1x128xf32> to vector<8x128xf32>
    %218 = arith.subf %194, %217 : vector<8x128xf32>
    %219 = math.exp %218 : vector<8x128xf32>
    %cst_91 = arith.constant dense<0.000000e+00> : vector<8x128xf32>
    %220 = tpu.matmul %15, %219, %cst_91 {dimension_numbers = #tpu.dot_dimension_numbers<[1], [0], [0], [1], [0, 0, 1, 1], [], []>} : vector<8x8xf32>, vector<8x128xf32>, vector<8x128xf32> -> vector<8x128xf32>
    %221 = vector.broadcast %216 : vector<1x128xf32> to vector<8x128xf32>
    %222 = arith.addf %221, %18 : vector<8x128xf32>
    %223 = math.log %220 : vector<8x128xf32>
    %224 = arith.addf %222, %223 : vector<8x128xf32>
    %225 = arith.addf %224, %199 : vector<8x128xf32>
    %cst_92 = arith.constant 0.000000e+00 : f32
    %226 = vector.broadcast %cst_92 : f32 to vector<1x128xf32>
    %227 = arith.cmpf ogt, %207, %226 : vector<1x128xf32>
    %228 = vector.shape_cast %227 : vector<1x128xi1> to vector<1x128xi1>
    %229 = vector.broadcast %228 : vector<1x128xi1> to vector<8x128xi1>
    %230 = arith.select %229, %225, %194 : vector<8x128xi1>, vector<8x128xf32>
    %231 = vector.shape_cast %227 : vector<1x128xi1> to vector<1x128xi1>
    %232 = vector.broadcast %231 : vector<1x128xi1> to vector<8x128xi1>
    %233 = arith.select %232, %205, %197 : vector<8x128xi1>, vector<8x128xf32>
    %c6 = arith.constant 6 : index
    %c0_93 = arith.constant 0 : index
    %c0_94 = arith.constant 0 : index
    %234 = vector.load %arg1[%c6, %c0_93, %c0_94] : memref<8x8x128xf32, #tpu.memory_space<vmem>>, vector<1x8x128xf32>
    %235 = vector.shape_cast %234 : vector<1x8x128xf32> to vector<8x128xf32>
    %c6_95 = arith.constant 6 : index
    %c0_96 = arith.constant 0 : index
    %c0_97 = arith.constant 0 : index
    %236 = vector.load %arg2[%c6_95, %c0_96, %c0_97] : memref<8x1x128xi32, #tpu.memory_space<vmem>>, vector<1x1x128xi32>
    %237 = vector.shape_cast %236 : vector<1x1x128xi32> to vector<1x128xi32>
    %238 = vector.broadcast %237 : vector<1x128xi32> to vector<8x128xi32>
    %239 = arith.cmpi eq, %0, %238 : vector<8x128xi32>
    %240 = arith.extui %239 : vector<8x128xi1> to vector<8x128xi32>
    %241 = arith.sitofp %240 : vector<8x128xi32> to vector<8x128xf32>
    %c6_98 = arith.constant 6 : index
    %c0_99 = arith.constant 0 : index
    %c0_100 = arith.constant 0 : index
    %242 = vector.load %arg3[%c6_98, %c0_99, %c0_100] : memref<8x1x128xf32, #tpu.memory_space<vmem>>, vector<1x1x128xf32>
    %243 = vector.shape_cast %242 : vector<1x1x128xf32> to vector<1x128xf32>
    %cst_101 = arith.constant dense<0.000000e+00> : vector<8x128xf32>
    %244 = tpu.matmul %1, %205, %cst_101 {dimension_numbers = #tpu.dot_dimension_numbers<[1], [0], [0], [1], [0, 0, 1, 1], [], []>} : vector<8x8xf32>, vector<8x128xf32>, vector<8x128xf32> -> vector<8x128xf32>
    %245 = arith.addf %244, %235 : vector<8x128xf32>
    %246 = arith.mulf %245, %241 : vector<8x128xf32>
    %cst_102 = arith.constant dense<0.000000e+00> : vector<128xf32>
    %247 = vector.multi_reduction <add>, %246, %cst_102 [0] : vector<8x128xf32> to vector<128xf32>
    %248 = vector.shape_cast %247 : vector<128xf32> to vector<1x128xf32>
    %249 = arith.mulf %243, %248 : vector<1x128xf32>
    %250 = arith.addf %214, %249 : vector<1x128xf32>
    %cst_103 = arith.constant dense<0xFF800000> : vector<128xf32>
    %251 = vector.multi_reduction <maximumf>, %230, %cst_103 [0] : vector<8x128xf32> to vector<128xf32>
    %252 = vector.shape_cast %251 : vector<128xf32> to vector<1x128xf32>
    %253 = vector.broadcast %252 : vector<1x128xf32> to vector<8x128xf32>
    %254 = arith.subf %230, %253 : vector<8x128xf32>
    %255 = math.exp %254 : vector<8x128xf32>
    %cst_104 = arith.constant dense<0.000000e+00> : vector<8x128xf32>
    %256 = tpu.matmul %15, %255, %cst_104 {dimension_numbers = #tpu.dot_dimension_numbers<[1], [0], [0], [1], [0, 0, 1, 1], [], []>} : vector<8x8xf32>, vector<8x128xf32>, vector<8x128xf32> -> vector<8x128xf32>
    %257 = vector.broadcast %252 : vector<1x128xf32> to vector<8x128xf32>
    %258 = arith.addf %257, %18 : vector<8x128xf32>
    %259 = math.log %256 : vector<8x128xf32>
    %260 = arith.addf %258, %259 : vector<8x128xf32>
    %261 = arith.addf %260, %235 : vector<8x128xf32>
    %cst_105 = arith.constant 0.000000e+00 : f32
    %262 = vector.broadcast %cst_105 : f32 to vector<1x128xf32>
    %263 = arith.cmpf ogt, %243, %262 : vector<1x128xf32>
    %264 = vector.shape_cast %263 : vector<1x128xi1> to vector<1x128xi1>
    %265 = vector.broadcast %264 : vector<1x128xi1> to vector<8x128xi1>
    %266 = arith.select %265, %261, %230 : vector<8x128xi1>, vector<8x128xf32>
    %267 = vector.shape_cast %263 : vector<1x128xi1> to vector<1x128xi1>
    %268 = vector.broadcast %267 : vector<1x128xi1> to vector<8x128xi1>
    %269 = arith.select %268, %241, %233 : vector<8x128xi1>, vector<8x128xf32>
    %c7 = arith.constant 7 : index
    %c0_106 = arith.constant 0 : index
    %c0_107 = arith.constant 0 : index
    %270 = vector.load %arg1[%c7, %c0_106, %c0_107] : memref<8x8x128xf32, #tpu.memory_space<vmem>>, vector<1x8x128xf32>
    %271 = vector.shape_cast %270 : vector<1x8x128xf32> to vector<8x128xf32>
    %c7_108 = arith.constant 7 : index
    %c0_109 = arith.constant 0 : index
    %c0_110 = arith.constant 0 : index
    %272 = vector.load %arg2[%c7_108, %c0_109, %c0_110] : memref<8x1x128xi32, #tpu.memory_space<vmem>>, vector<1x1x128xi32>
    %273 = vector.shape_cast %272 : vector<1x1x128xi32> to vector<1x128xi32>
    %274 = vector.broadcast %273 : vector<1x128xi32> to vector<8x128xi32>
    %275 = arith.cmpi eq, %0, %274 : vector<8x128xi32>
    %276 = arith.extui %275 : vector<8x128xi1> to vector<8x128xi32>
    %277 = arith.sitofp %276 : vector<8x128xi32> to vector<8x128xf32>
    %c7_111 = arith.constant 7 : index
    %c0_112 = arith.constant 0 : index
    %c0_113 = arith.constant 0 : index
    %278 = vector.load %arg3[%c7_111, %c0_112, %c0_113] : memref<8x1x128xf32, #tpu.memory_space<vmem>>, vector<1x1x128xf32>
    %279 = vector.shape_cast %278 : vector<1x1x128xf32> to vector<1x128xf32>
    %cst_114 = arith.constant dense<0.000000e+00> : vector<8x128xf32>
    %280 = tpu.matmul %1, %241, %cst_114 {dimension_numbers = #tpu.dot_dimension_numbers<[1], [0], [0], [1], [0, 0, 1, 1], [], []>} : vector<8x8xf32>, vector<8x128xf32>, vector<8x128xf32> -> vector<8x128xf32>
    %281 = arith.addf %280, %271 : vector<8x128xf32>
    %282 = arith.mulf %281, %277 : vector<8x128xf32>
    %cst_115 = arith.constant dense<0.000000e+00> : vector<128xf32>
    %283 = vector.multi_reduction <add>, %282, %cst_115 [0] : vector<8x128xf32> to vector<128xf32>
    %284 = vector.shape_cast %283 : vector<128xf32> to vector<1x128xf32>
    %285 = arith.mulf %279, %284 : vector<1x128xf32>
    %286 = arith.addf %250, %285 : vector<1x128xf32>
    %cst_116 = arith.constant dense<0xFF800000> : vector<128xf32>
    %287 = vector.multi_reduction <maximumf>, %266, %cst_116 [0] : vector<8x128xf32> to vector<128xf32>
    %288 = vector.shape_cast %287 : vector<128xf32> to vector<1x128xf32>
    %289 = vector.broadcast %288 : vector<1x128xf32> to vector<8x128xf32>
    %290 = arith.subf %266, %289 : vector<8x128xf32>
    %291 = math.exp %290 : vector<8x128xf32>
    %cst_117 = arith.constant dense<0.000000e+00> : vector<8x128xf32>
    %292 = tpu.matmul %15, %291, %cst_117 {dimension_numbers = #tpu.dot_dimension_numbers<[1], [0], [0], [1], [0, 0, 1, 1], [], []>} : vector<8x8xf32>, vector<8x128xf32>, vector<8x128xf32> -> vector<8x128xf32>
    %293 = vector.broadcast %288 : vector<1x128xf32> to vector<8x128xf32>
    %294 = arith.addf %293, %18 : vector<8x128xf32>
    %295 = math.log %292 : vector<8x128xf32>
    %296 = arith.addf %294, %295 : vector<8x128xf32>
    %297 = arith.addf %296, %271 : vector<8x128xf32>
    %cst_118 = arith.constant 0.000000e+00 : f32
    %298 = vector.broadcast %cst_118 : f32 to vector<1x128xf32>
    %299 = arith.cmpf ogt, %279, %298 : vector<1x128xf32>
    %300 = vector.shape_cast %299 : vector<1x128xi1> to vector<1x128xi1>
    %301 = vector.broadcast %300 : vector<1x128xi1> to vector<8x128xi1>
    %302 = arith.select %301, %297, %266 : vector<8x128xi1>, vector<8x128xf32>
    %303 = vector.shape_cast %299 : vector<1x128xi1> to vector<1x128xi1>
    %304 = vector.broadcast %303 : vector<1x128xi1> to vector<8x128xi1>
    %305 = arith.select %304, %277, %269 : vector<8x128xi1>, vector<8x128xf32>
    %c0_119 = arith.constant 0 : index
    %c0_120 = arith.constant 0 : index
    %306 = vector.load %arg12[%c0_119, %c0_120] : memref<8x128xf32, #tpu.memory_space<vmem>>, vector<8x128xf32>
    tpu.vector_store %arg12[%c0_119, %c0_120], %302 {strides = array<i32>} : memref<8x128xf32, #tpu.memory_space<vmem>>, vector<8x128xf32>,
    %c0_121 = arith.constant 0 : index
    %c0_122 = arith.constant 0 : index
    %307 = vector.load %arg13[%c0_121, %c0_122] : memref<1x128xf32, #tpu.memory_space<vmem>>, vector<1x128xf32>
    tpu.vector_store %arg13[%c0_121, %c0_122], %286 {strides = array<i32>} : memref<1x128xf32, #tpu.memory_space<vmem>>, vector<1x128xf32>,
    %c0_123 = arith.constant 0 : index
    %c0_124 = arith.constant 0 : index
    %308 = vector.load %arg14[%c0_123, %c0_124] : memref<8x128xf32, #tpu.memory_space<vmem>>, vector<8x128xf32>
    tpu.vector_store %arg14[%c0_123, %c0_124], %277 {strides = array<i32>} : memref<8x128xf32, #tpu.memory_space<vmem>>, vector<8x128xf32>,
    %c0_125 = arith.constant 0 : index
    %c0_126 = arith.constant 0 : index
    %309 = vector.load %arg15[%c0_125, %c0_126] : memref<8x128xf32, #tpu.memory_space<vmem>>, vector<8x128xf32>
    tpu.vector_store %arg15[%c0_125, %c0_126], %305 {strides = array<i32>} : memref<8x128xf32, #tpu.memory_space<vmem>>, vector<8x128xf32>,
    %c0_i32_127 = arith.constant 0 : i32
    %310 = arith.cmpi eq, %arg0, %c0_i32_127 : i32
    %311 = arith.extui %310 : i1 to i32
    %c0_i32_128 = arith.constant 0 : i32
    %312 = arith.cmpi ne, %311, %c0_i32_128 : i32
    scf.if %312 {
      %c0_129 = arith.constant 0 : index
      %c0_130 = arith.constant 0 : index
      %313 = vector.load %arg5[%c0_129, %c0_130] : memref<8x1xf32, #tpu.memory_space<vmem>>, vector<8x1xf32>
      %314 = vector.broadcast %313 : vector<8x1xf32> to vector<8x128xf32>
      %315 = arith.mulf %314, %305 : vector<8x128xf32>
      %cst_131 = arith.constant dense<0.000000e+00> : vector<128xf32>
      %316 = vector.multi_reduction <add>, %315, %cst_131 [0] : vector<8x128xf32> to vector<128xf32>
      %317 = vector.shape_cast %316 : vector<128xf32> to vector<1x128xf32>
      %318 = arith.addf %286, %317 : vector<1x128xf32>
      %319 = vector.broadcast %313 : vector<8x1xf32> to vector<8x128xf32>
      %320 = arith.addf %302, %319 : vector<8x128xf32>
      %cst_132 = arith.constant dense<0xFF800000> : vector<128xf32>
      %321 = vector.multi_reduction <maximumf>, %320, %cst_132 [0] : vector<8x128xf32> to vector<128xf32>
      %322 = vector.shape_cast %321 : vector<128xf32> to vector<1x128xf32>
      %323 = vector.broadcast %322 : vector<1x128xf32> to vector<8x128xf32>
      %324 = arith.subf %320, %323 : vector<8x128xf32>
      %325 = math.exp %324 : vector<8x128xf32>
      %cst_133 = arith.constant dense<0.000000e+00> : vector<128xf32>
      %326 = vector.multi_reduction <add>, %325, %cst_133 [0] : vector<8x128xf32> to vector<128xf32>
      %327 = vector.shape_cast %326 : vector<128xf32> to vector<1x128xf32>
      %328 = math.log %327 : vector<1x128xf32>
      %329 = arith.addf %322, %328 : vector<1x128xf32>
      %330 = tpu.iota {dimensions = array<i32: 1>} : vector<1x128xi32>
      %c2_i32 = arith.constant 2 : i32
      %331 = vector.broadcast %c2_i32 : i32 to vector<1x128xi32>
      %332 = arith.cmpi slt, %330, %331 : vector<1x128xi32>
      %333 = arith.extui %332 : vector<1x128xi1> to vector<1x128xi32>
      %334 = arith.sitofp %333 : vector<1x128xi32> to vector<1x128xf32>
      %335 = arith.subf %329, %318 : vector<1x128xf32>
      %336 = arith.mulf %335, %334 : vector<1x128xf32>
      %337 = vector.shape_cast %336 : vector<1x128xf32> to vector<1x1x128xf32>
      %cst_134 = arith.constant dense<0.000000e+00> : vector<1xf32>
      %338 = vector.multi_reduction <add>, %337, %cst_134 [1, 2] : vector<1x1x128xf32> to vector<1xf32>
      %339 = vector.shape_cast %338 : vector<1xf32> to vector<1x1x1xf32>
      %340 = vector.extract %339[0, 0, 0] : f32 from vector<1x1x1xf32>
      %cst_135 = arith.constant 2.000000e+00 : f32
      %341 = arith.divf %340, %cst_135 : f32
      %c0_136 = arith.constant 0 : index
      %c0_137 = arith.constant 0 : index
      %342 = vector.load %arg7[%c0_136, %c0_137] : memref<8x128xf32, #tpu.memory_space<vmem>>, vector<8x128xf32>
      %c0_138 = arith.constant 0 : index
      %c0_139 = arith.constant 0 : index
      %343 = vector.load %arg8[%c0_138, %c0_139] : memref<1x128xi32, #tpu.memory_space<vmem>>, vector<1x128xi32>
      %344 = tpu.iota {dimensions = array<i32: 0>} : vector<8x128xi32>
      %345 = vector.broadcast %343 : vector<1x128xi32> to vector<8x128xi32>
      %346 = arith.cmpi eq, %344, %345 : vector<8x128xi32>
      %347 = arith.extui %346 : vector<8x128xi1> to vector<8x128xi32>
      %348 = arith.sitofp %347 : vector<8x128xi32> to vector<8x128xf32>
      %cst_140 = arith.constant dense<0xFF800000> : vector<128xf32>
      %349 = vector.multi_reduction <maximumf>, %342, %cst_140 [0] : vector<8x128xf32> to vector<128xf32>
      %350 = vector.shape_cast %349 : vector<128xf32> to vector<1x128xf32>
      %351 = vector.broadcast %350 : vector<1x128xf32> to vector<8x128xf32>
      %352 = arith.subf %342, %351 : vector<8x128xf32>
      %353 = math.exp %352 : vector<8x128xf32>
      %cst_141 = arith.constant dense<0.000000e+00> : vector<128xf32>
      %354 = vector.multi_reduction <add>, %353, %cst_141 [0] : vector<8x128xf32> to vector<128xf32>
      %355 = vector.shape_cast %354 : vector<128xf32> to vector<1x128xf32>
      %356 = math.log %355 : vector<1x128xf32>
      %357 = arith.addf %350, %356 : vector<1x128xf32>
      %358 = arith.mulf %342, %348 : vector<8x128xf32>
      %cst_142 = arith.constant dense<0.000000e+00> : vector<128xf32>
      %359 = vector.multi_reduction <add>, %358, %cst_142 [0] : vector<8x128xf32> to vector<128xf32>
      %360 = vector.shape_cast %359 : vector<128xf32> to vector<1x128xf32>
      %361 = arith.subf %357, %360 : vector<1x128xf32>
      %362 = tpu.iota {dimensions = array<i32: 1>} : vector<1x128xi32>
      %c6_i32 = arith.constant 6 : i32
      %363 = vector.broadcast %c6_i32 : i32 to vector<1x128xi32>
      %364 = arith.cmpi slt, %362, %363 : vector<1x128xi32>
      %365 = arith.extui %364 : vector<1x128xi1> to vector<1x128xi32>
      %366 = arith.sitofp %365 : vector<1x128xi32> to vector<1x128xf32>
      %c0_i32_143 = arith.constant 0 : i32
      %367 = vector.broadcast %c0_i32_143 : i32 to vector<1x128xi32>
      %368 = arith.cmpi ne, %343, %367 : vector<1x128xi32>
      %369 = arith.extui %368 : vector<1x128xi1> to vector<1x128xi32>
      %370 = arith.sitofp %369 : vector<1x128xi32> to vector<1x128xf32>
      %371 = arith.mulf %366, %370 : vector<1x128xf32>
      %372 = arith.mulf %361, %371 : vector<1x128xf32>
      %373 = vector.shape_cast %372 : vector<1x128xf32> to vector<1x1x128xf32>
      %cst_144 = arith.constant dense<0.000000e+00> : vector<1xf32>
      %374 = vector.multi_reduction <add>, %373, %cst_144 [1, 2] : vector<1x1x128xf32> to vector<1xf32>
      %375 = vector.shape_cast %374 : vector<1xf32> to vector<1x1x1xf32>
      %376 = vector.extract %375[0, 0, 0] : f32 from vector<1x1x1xf32>
      %377 = vector.shape_cast %371 : vector<1x128xf32> to vector<1x1x128xf32>
      %cst_145 = arith.constant dense<0.000000e+00> : vector<1xf32>
      %378 = vector.multi_reduction <add>, %377, %cst_145 [1, 2] : vector<1x1x128xf32> to vector<1xf32>
      %379 = vector.shape_cast %378 : vector<1xf32> to vector<1x1x1xf32>
      %380 = vector.extract %379[0, 0, 0] : f32 from vector<1x1x1xf32>
      %cst_146 = arith.constant 1.000000e+00 : f32
      %381 = arith.maximumf %380, %cst_146 : f32
      %382 = arith.divf %376, %381 : f32
      %c0_147 = arith.constant 0 : index
      %c0_148 = arith.constant 0 : index
      %383 = vector.load %arg9[%c0_147, %c0_148] : memref<8x128xf32, #tpu.memory_space<vmem>>, vector<8x128xf32>
      %c0_149 = arith.constant 0 : index
      %c0_150 = arith.constant 0 : index
      %384 = vector.load %arg10[%c0_149, %c0_150] : memref<1x128xi32, #tpu.memory_space<vmem>>, vector<1x128xi32>
      %385 = tpu.iota {dimensions = array<i32: 0>} : vector<8x128xi32>
      %386 = vector.broadcast %384 : vector<1x128xi32> to vector<8x128xi32>
      %387 = arith.cmpi eq, %385, %386 : vector<8x128xi32>
      %388 = arith.extui %387 : vector<8x128xi1> to vector<8x128xi32>
      %389 = arith.sitofp %388 : vector<8x128xi32> to vector<8x128xf32>
      %cst_151 = arith.constant dense<0xFF800000> : vector<128xf32>
      %390 = vector.multi_reduction <maximumf>, %383, %cst_151 [0] : vector<8x128xf32> to vector<128xf32>
      %391 = vector.shape_cast %390 : vector<128xf32> to vector<1x128xf32>
      %392 = vector.broadcast %391 : vector<1x128xf32> to vector<8x128xf32>
      %393 = arith.subf %383, %392 : vector<8x128xf32>
      %394 = math.exp %393 : vector<8x128xf32>
      %cst_152 = arith.constant dense<0.000000e+00> : vector<128xf32>
      %395 = vector.multi_reduction <add>, %394, %cst_152 [0] : vector<8x128xf32> to vector<128xf32>
      %396 = vector.shape_cast %395 : vector<128xf32> to vector<1x128xf32>
      %397 = math.log %396 : vector<1x128xf32>
      %398 = arith.addf %391, %397 : vector<1x128xf32>
      %399 = arith.mulf %383, %389 : vector<8x128xf32>
      %cst_153 = arith.constant dense<0.000000e+00> : vector<128xf32>
      %400 = vector.multi_reduction <add>, %399, %cst_153 [0] : vector<8x128xf32> to vector<128xf32>
      %401 = vector.shape_cast %400 : vector<128xf32> to vector<1x128xf32>
      %402 = arith.subf %398, %401 : vector<1x128xf32>
      %403 = tpu.iota {dimensions = array<i32: 1>} : vector<1x128xi32>
      %c2_i32_154 = arith.constant 2 : i32
      %404 = vector.broadcast %c2_i32_154 : i32 to vector<1x128xi32>
      %405 = arith.cmpi slt, %403, %404 : vector<1x128xi32>
      %406 = arith.extui %405 : vector<1x128xi1> to vector<1x128xi32>
      %407 = arith.sitofp %406 : vector<1x128xi32> to vector<1x128xf32>
      %408 = arith.mulf %402, %407 : vector<1x128xf32>
      %409 = vector.shape_cast %408 : vector<1x128xf32> to vector<1x1x128xf32>
      %cst_155 = arith.constant dense<0.000000e+00> : vector<1xf32>
      %410 = vector.multi_reduction <add>, %409, %cst_155 [1, 2] : vector<1x1x128xf32> to vector<1xf32>
      %411 = vector.shape_cast %410 : vector<1xf32> to vector<1x1x1xf32>
      %412 = vector.extract %411[0, 0, 0] : f32 from vector<1x1x1xf32>
      %413 = vector.shape_cast %407 : vector<1x128xf32> to vector<1x1x128xf32>
      %cst_156 = arith.constant dense<0.000000e+00> : vector<1xf32>
      %414 = vector.multi_reduction <add>, %413, %cst_156 [1, 2] : vector<1x1x128xf32> to vector<1xf32>
      %415 = vector.shape_cast %414 : vector<1xf32> to vector<1x1x1xf32>
      %416 = vector.extract %415[0, 0, 0] : f32 from vector<1x1x1xf32>
      %cst_157 = arith.constant 1.000000e+00 : f32
      %417 = arith.maximumf %416, %cst_157 : f32
      %418 = arith.divf %412, %417 : f32
      %419 = arith.addf %341, %382 : f32
      %420 = arith.addf %419, %418 : f32
      %cst_158 = arith.constant 0.333333343 : f32
      %421 = arith.mulf %420, %cst_158 : f32
      %c0_159 = arith.constant 0 : index
      %c0_160 = arith.constant 0 : index
      %422 = memref.load %arg11[%c0_159, %c0_160] : memref<1x4xf32, #tpu.memory_space<smem>>
      memref.store %421, %arg11[%c0_159, %c0_160] : memref<1x4xf32, #tpu.memory_space<smem>>
      %c0_161 = arith.constant 0 : index
      %c1_162 = arith.constant 1 : index
      %423 = memref.load %arg11[%c0_161, %c1_162] : memref<1x4xf32, #tpu.memory_space<smem>>
      memref.store %341, %arg11[%c0_161, %c1_162] : memref<1x4xf32, #tpu.memory_space<smem>>
      %c0_163 = arith.constant 0 : index
      %c2_164 = arith.constant 2 : index
      %424 = memref.load %arg11[%c0_163, %c2_164] : memref<1x4xf32, #tpu.memory_space<smem>>
      memref.store %382, %arg11[%c0_163, %c2_164] : memref<1x4xf32, #tpu.memory_space<smem>>
      %c0_165 = arith.constant 0 : index
      %c3_166 = arith.constant 3 : index
      %425 = memref.load %arg11[%c0_165, %c3_166] : memref<1x4xf32, #tpu.memory_space<smem>>
      memref.store %418, %arg11[%c0_165, %c3_166] : memref<1x4xf32, #tpu.memory_space<smem>>
    } else {
    }
    return
  }
  func.func @transform_0(%arg0: i32) -> (i32, i32, i32) {
    %c0_i32 = arith.constant 0 : i32
    %c0_i32_0 = arith.constant 0 : i32
    %c0_i32_1 = arith.constant 0 : i32
    return %arg0, %c0_i32, %c0_i32_0 : i32, i32, i32
  }
  func.func @transform_1(%arg0: i32) -> (i32, i32, i32) {
    %c0_i32 = arith.constant 0 : i32
    %c0_i32_0 = arith.constant 0 : i32
    %c0_i32_1 = arith.constant 0 : i32
    return %arg0, %c0_i32, %c0_i32_0 : i32, i32, i32
  }
  func.func @transform_2(%arg0: i32) -> (i32, i32, i32) {
    %c0_i32 = arith.constant 0 : i32
    %c0_i32_0 = arith.constant 0 : i32
    %c0_i32_1 = arith.constant 0 : i32
    return %arg0, %c0_i32, %c0_i32_0 : i32, i32, i32
  }
  func.func @transform_3(%arg0: i32) -> (i32, i32) {
    %c0_i32 = arith.constant 0 : i32
    %c0_i32_0 = arith.constant 0 : i32
    %c0_i32_1 = arith.constant 0 : i32
    return %c0_i32, %c0_i32_0 : i32, i32
  }
  func.func @transform_4(%arg0: i32) -> (i32, i32) {
    %c0_i32 = arith.constant 0 : i32
    %c0_i32_0 = arith.constant 0 : i32
    %c0_i32_1 = arith.constant 0 : i32
    return %c0_i32, %c0_i32_0 : i32, i32
  }
  func.func @transform_5(%arg0: i32) -> (i32, i32) {
    %c0_i32 = arith.constant 0 : i32
    %c0_i32_0 = arith.constant 0 : i32
    %c0_i32_1 = arith.constant 0 : i32
    return %c0_i32, %c0_i32_0 : i32, i32
  }
  func.func @transform_6(%arg0: i32) -> (i32, i32) {
    %c0_i32 = arith.constant 0 : i32
    %c0_i32_0 = arith.constant 0 : i32
    %c0_i32_1 = arith.constant 0 : i32
    return %c0_i32, %c0_i32_0 : i32, i32
  }
  func.func @transform_7(%arg0: i32) -> (i32, i32) {
    %c0_i32 = arith.constant 0 : i32
    %c0_i32_0 = arith.constant 0 : i32
    %c0_i32_1 = arith.constant 0 : i32
    return %c0_i32, %c0_i32_0 : i32, i32
  }
  func.func @transform_8(%arg0: i32) -> (i32, i32) {
    %c0_i32 = arith.constant 0 : i32
    %c0_i32_0 = arith.constant 0 : i32
    %c0_i32_1 = arith.constant 0 : i32
    return %c0_i32, %c0_i32_0 : i32, i32
  }
  func.func @transform_9(%arg0: i32) -> (i32, i32) {
    %c0_i32 = arith.constant 0 : i32
    %c0_i32_0 = arith.constant 0 : i32
    %c0_i32_1 = arith.constant 0 : i32
    return %c0_i32, %c0_i32_0 : i32, i32
  }
  func.func @transform_10(%arg0: i32) -> (i32, i32) {
    %c0_i32 = arith.constant 0 : i32
    %c0_i32_0 = arith.constant 0 : i32
    %c0_i32_1 = arith.constant 0 : i32
    return %c0_i32, %c0_i32_0 : i32, i32
  }
}

</mosaic_0001>

<llo_original>
// kernel: tpu_custom_call.1
$region0: #{tpu_custom_call.1}
  #allocation0 [shape = 'u32[]', space=smem, size = 0x4, offset = 0x4, fixed_abs, tag = 'smem constant byte address 0x4 - core index']
  #allocation1 [shape = 'u32[72,128]{1,0:T(1,128)}', space=vmem, size = 0x9000, scoped, tag = 'internal scratch']
  #allocation2 [shape = 'f32[8,128]{1,0:T(8,128)}', space=vmem, size = 0x1000, scoped, tag = 'scratch operand']
  #allocation3 [shape = 'f32[1,128]{1,0:T(1,128)}', space=vmem, size = 0x200, scoped, tag = 'scratch operand']
  #allocation4 [shape = 'f32[8,128]{1,0:T(8,128)}', space=vmem, size = 0x1000, scoped, tag = 'scratch operand']
  #allocation5 [shape = 'f32[8,128]{1,0:T(8,128)}', space=vmem, size = 0x1000, scoped, tag = 'scratch operand']
  #allocation6 [shape = 'f32[8,8]{1,0:T(8,128)}', space=vmem, size = 0x1000, scoped, tag = 'scratch operand']
  #allocation7 [shape = 'f32[8,1]{1,0:T(8,128)}', space=vmem, size = 0x1000, scoped, tag = 'scratch operand']
  %s0 = inlined_call_operand.hbm [shape: f32[8,8,128], index: 0, kind: input, shape index: {}]
  %s1 = inlined_call_operand.vmem [shape: s32[8,1,128], index: 1, kind: input, shape index: {}]
  %s2 = inlined_call_operand.vmem [shape: f32[8,1,128], index: 2, kind: input, shape index: {}]
  %s3 = inlined_call_operand.vmem [shape: f32[8,1], index: 3, kind: input, shape index: {}]
  %s4 = inlined_call_operand.vmem [shape: f32[8,1], index: 4, kind: input, shape index: {}]
  %s5 = inlined_call_operand.hbm [shape: f32[8,8], index: 5, kind: input, shape index: {}]
  %s6 = inlined_call_operand.hbm [shape: f32[8,128], index: 6, kind: input, shape index: {}]
  %s7 = inlined_call_operand.vmem [shape: s32[1,128], index: 7, kind: input, shape index: {}]
  %s8 = inlined_call_operand.hbm [shape: f32[8,128], index: 8, kind: input, shape index: {}]
  %s9 = inlined_call_operand.vmem [shape: s32[1,128], index: 9, kind: input, shape index: {}]
  %s10 = inlined_call_operand.hbm [shape: f32[1,4], index: 10, kind: output, shape index: {}]
  %s11 = sld [smem:[#allocation0]]
  $region74: #{tpu_custom_call.1} parent=0
    _
  %s13 = ssub.s32 1, %s11
  %s14 = scalar_select 0, %s13, %s11
  $region1: #{tpu_custom_call.1} parent=0
    #allocation8 [shape = 'u8[32768]{0}', space=vmem, size = 0x8000, scoped, tag = 'input window, operand 0, single buffered']
    #allocation9 [shape = 's32[1]{0}', space=sflag, size = 0x4, scoped, tag = 'scoped memory for tpu_custom_call.1']
    #allocation10 [shape = 's32[1]{0}', space=sflag, size = 0x4, scoped, tag = 'scoped memory for tpu_custom_call.1']
    #allocation11 [shape = 'u8[4096]{0}', space=vmem, size = 0x1000, scoped, tag = 'input window, operand 5, single buffered']
    #allocation12 [shape = 's32[1]{0}', space=sflag, size = 0x4, scoped, tag = 'scoped memory for tpu_custom_call.1']
    #allocation13 [shape = 'u8[4096]{0}', space=vmem, size = 0x1000, scoped, tag = 'input window, operand 6, single buffered']
    #allocation14 [shape = 'u8[4096]{0}', space=vmem, size = 0x1000, scoped, tag = 'input window, operand 8, single buffered']
    #allocation15 [shape = 's32[1]{0}', space=sflag, size = 0x4, scoped, tag = 'scoped memory for tpu_custom_call.1']
    #allocation16 [shape = 'u8[512]{0}', space=smem, size = 0x200, scoped, tag = 'output window, operand 0, single buffered']
    %15 = vsyncpa [#allocation9], 0
    %16 = vsyncpa [#allocation12], 0
    %17 = vsyncpa [#allocation15], 0
    %18 = vsyncpa [#allocation10], 0
    // Predicated region
    $region2: #{tpu_custom_call.1} parent=1 // pred_check
      _
    $region3: #{tpu_custom_call.1} parent=1 // pred_check_branch
      %20 = sbr.rel (0) target = $region5
    $region4: #{tpu_custom_call.1} parent=1 // pred_region
      %22 = vsyncadd [#allocation9], 0
      %s23 = sshll.u32 %s0, 4
      %s24 = int_to_ptr.hbm [resolvable:$true] %s23
      %s25 = sshll.u32 [#allocation8], 4
      %s26 = int_to_ptr.vmem [resolvable:$true] %s25
      %31 = dma.hbm_to_vmem [thread:$0]  %s24, 1024, %s26, [#allocation9], 128, 128, 8
    $region5: #{tpu_custom_call.1} parent=1 // pred_fallthru
      _
    // Predicated region
    $region6: #{tpu_custom_call.1} parent=1 // pred_check
      _
    $region7: #{tpu_custom_call.1} parent=1 // pred_check_branch
      %33 = sbr.rel (0) target = $region9
    $region8: #{tpu_custom_call.1} parent=1 // pred_region
      _
    $region9: #{tpu_custom_call.1} parent=1 // pred_fallthru
      _
    // Predicated region
    $region10: #{tpu_custom_call.1} parent=1 // pred_check
      _
    $region11: #{tpu_custom_call.1} parent=1 // pred_check_branch
      %35 = sbr.rel (0) target = $region13
    $region12: #{tpu_custom_call.1} parent=1 // pred_region
      _
    $region13: #{tpu_custom_call.1} parent=1 // pred_fallthru
      _
    // Predicated region
    $region14: #{tpu_custom_call.1} parent=1 // pred_check
      _
    $region15: #{tpu_custom_call.1} parent=1 // pred_check_branch
      %37 = sbr.rel (0) target = $region17
    $region16: #{tpu_custom_call.1} parent=1 // pred_region
      _
    $region17: #{tpu_custom_call.1} parent=1 // pred_fallthru
      _
    // Predicated region
    $region18: #{tpu_custom_call.1} parent=1 // pred_check
      _
    $region19: #{tpu_custom_call.1} parent=1 // pred_check_branch
      %39 = sbr.rel (0) target = $region21
    $region20: #{tpu_custom_call.1} parent=1 // pred_region
      _
    $region21: #{tpu_custom_call.1} parent=1 // pred_fallthru
      _
    // Predicated region
    $region22: #{tpu_custom_call.1} parent=1 // pred_check
      _
    $region23: #{tpu_custom_call.1} parent=1 // pred_check_branch
      %41 = sbr.rel (0) target = $region25
    $region24: #{tpu_custom_call.1} parent=1 // pred_region
      %43 = vsyncadd [#allocation12], 0
      %s45 = sshll.u32 %s5, 4
      %s46 = int_to_ptr.hbm [resolvable:$true] %s45
      %s47 = sshll.u32 [#allocation11], 4
      %s48 = int_to_ptr.vmem [resolvable:$true] %s47
      %50 = dma.hbm_to_vmem [thread:$0]  %s46, 128, %s48, [#allocation12]
    $region25: #{tpu_custom_call.1} parent=1 // pred_fallthru
      _
    // Predicated region
    $region26: #{tpu_custom_call.1} parent=1 // pred_check
      _
    $region27: #{tpu_custom_call.1} parent=1 // pred_check_branch
      %52 = sbr.rel (0) target = $region29
    $region28: #{tpu_custom_call.1} parent=1 // pred_region
      %54 = vsyncadd [#allocation12], 0
      %s56 = sshll.u32 %s6, 4
      %s57 = int_to_ptr.hbm [resolvable:$true] %s56
      %s58 = sshll.u32 [#allocation13], 4
      %s59 = int_to_ptr.vmem [resolvable:$true] %s58
      %61 = dma.hbm_to_vmem [thread:$0]  %s57, 128, %s59, [#allocation12]
    $region29: #{tpu_custom_call.1} parent=1 // pred_fallthru
      _
    // Predicated region
    $region30: #{tpu_custom_call.1} parent=1 // pred_check
      _
    $region31: #{tpu_custom_call.1} parent=1 // pred_check_branch
      %63 = sbr.rel (0) target = $region33
    $region32: #{tpu_custom_call.1} parent=1 // pred_region
      _
    $region33: #{tpu_custom_call.1} parent=1 // pred_fallthru
      _
    // Predicated region
    $region34: #{tpu_custom_call.1} parent=1 // pred_check
      _
    $region35: #{tpu_custom_call.1} parent=1 // pred_check_branch
      %65 = sbr.rel (0) target = $region37
    $region36: #{tpu_custom_call.1} parent=1 // pred_region
      %67 = vsyncadd [#allocation15], 0
      %s69 = sshll.u32 %s8, 4
      %s70 = int_to_ptr.hbm [resolvable:$true] %s69
      %s71 = sshll.u32 [#allocation14], 4
      %s72 = int_to_ptr.vmem [resolvable:$true] %s71
      %74 = dma.hbm_to_vmem [thread:$0]  %s70, 128, %s72, [#allocation15]
    $region37: #{tpu_custom_call.1} parent=1 // pred_fallthru
      _
    // Predicated region
    $region38: #{tpu_custom_call.1} parent=1 // pred_check
      _
    $region39: #{tpu_custom_call.1} parent=1 // pred_check_branch
      %76 = sbr.rel (0) target = $region41
    $region40: #{tpu_custom_call.1} parent=1 // pred_region
      _
    $region41: #{tpu_custom_call.1} parent=1 // pred_fallthru
      _
    // Predicated region
    $region42: #{tpu_custom_call.1} parent=1 // pred_check
      _
    $region43: #{tpu_custom_call.1} parent=1 // pred_check_branch
      %78 = sbr.rel (0) target = $region45
    $region44: #{tpu_custom_call.1} parent=1 // pred_region
      %80 = dma.done [#allocation9], 1024
    $region45: #{tpu_custom_call.1} parent=1 // pred_fallthru
      _
    // Predicated region
    $region46: #{tpu_custom_call.1} parent=1 // pred_check
      _
    $region47: #{tpu_custom_call.1} parent=1 // pred_check_branch
      %82 = sbr.rel (0) target = $region49
    $region48: #{tpu_custom_call.1} parent=1 // pred_region
      %84 = dma.done [#allocation12], 128
    $region49: #{tpu_custom_call.1} parent=1 // pred_fallthru
      _
    // Predicated region
    $region50: #{tpu_custom_call.1} parent=1 // pred_check
      _
    $region51: #{tpu_custom_call.1} parent=1 // pred_check_branch
      %86 = sbr.rel (0) target = $region53
    $region52: #{tpu_custom_call.1} parent=1 // pred_region
      %88 = dma.done [#allocation12], 128
    $region53: #{tpu_custom_call.1} parent=1 // pred_fallthru
      _
    // Predicated region
    $region54: #{tpu_custom_call.1} parent=1 // pred_check
      _
    $region55: #{tpu_custom_call.1} parent=1 // pred_check_branch
      %90 = sbr.rel (0) target = $region57
    $region56: #{tpu_custom_call.1} parent=1 // pred_region
      %92 = dma.done [#allocation15], 128
    $region57: #{tpu_custom_call.1} parent=1 // pred_fallthru
      _
    %v93 = vlaneseq
    %v94 = vshrl.u32 %v93, 7
    %v95 = vld [vmem:[#allocation11] sm:$0xff]
    %v96 = vld [vmem:[#allocation8] sm:$0xff]
    %v97 = vld [vmem:[%s1] sm:$0x1]
    %v98 = vperm.slane %v97, 0
    %vm99 = vcmp.eq.s32.totalorder %v94, %v98
    %v100 = vsel %vm99, 1, 0
    %v101 = vcvt.s32.f32 %v100
    %v102 = vld [vmem:[%s2] sm:$0x1]
    %p103 = scmp.eq.s32.totalorder 0, 0
    // Predicated region
    $region58: #{tpu_custom_call.1} parent=1 // pred_check
      %p104 = pneg %p103
    $region59: #{tpu_custom_call.1} parent=1 // pred_check_branch
      %106 = sbr.rel (%p104) target = $region61
    $region60: #{tpu_custom_call.1} parent=1 // pred_region
      %v107 = vld [vmem:[%s3] sm:$0xff]
      %109 = vset.pattern.permute.xlu0 0
      %110 = vperm.xlu0 %109, %v107
      %v111 = vpop.permute.xlu0 %110
      %v113 = vadd.f32 %v111, %v96
      %114 = vst [vmem:[#allocation2] sm:$0xff] %v113
      %v115 = vmul.f32 %v113, %v101
      %v116 = vrot.slane %v115, 4
      %v117 = vadd.f32 %v115, %v116
      %v118 = vrot.slane %v117, 2
      %v119 = vadd.f32 %v117, %v118
      %v120 = vrot.slane %v119, 1
      %v121 = vadd.f32 %v119, %v120
      %122 = vst [vmem:[#allocation3] sm:$0x1] %v121
      %123 = vst [vmem:[#allocation4] sm:$0xff] %v101
      %124 = vst [vmem:[#allocation5] sm:$0xff] %v101
      %vm125 = vcmask 64512
      %v126 = vsel %vm125, %v95, -inf
      %127 = vmax.xlane.f32.xlu0 %v126
      %v128 = vpop.xlane.xlu0 %127
      %vm129 = vcmask 7168
      %130 = vst.msk [vmem:[#allocation7] sm:$0xff] %vm129, %v128
      %v131 = vsub.f32 %v95, %v128
      %v132 = vmul.f32 %v131, 1.442695
      %v133 = vpow.pop %v132
      %134 = vst.msk [vmem:[#allocation6] sm:$0xff] %vm125, %v133
    $region61: #{tpu_custom_call.1} parent=1 // pred_fallthru
      _
    %v135 = vld [vmem:[#allocation6] sm:$0xff]
    %v136 = vld [vmem:[#allocation7] sm:$0xff]
    %138 = vset.pattern.permute.xlu0 0
    %139 = vperm.xlu0 %138, %v136
    %v140 = vpop.permute.xlu0 %139
    %v142 = vld [vmem:[#allocation2] sm:$0xff]
    %v143 = vld [vmem:[#allocation3] sm:$0x1]
    %v144 = vld [vmem:[#allocation4] sm:$0xff]
    %v145 = vld [vmem:[#allocation5] sm:$0xff]
    %vm146 = vcmask 64512
    %v148 = vsel %vm146, %v95, 0
    %150 = vmatpush.msra.mxu0 0.0
    %151 = vmatpush.msra.mxu0 0.0
    %152 = vmatpush.msra.mxu0 0.0
    %153 = vmatpush.msra.mxu0 0.0
    %154 = vmatpush.msra.mxu0 0.0
    %155 = vmatpush.msra.mxu0 0.0
    %156 = vmatpush.msra.mxu0 0.0
    %157 = vmatpush.msra.mxu0 0.0
    %158 = vmatpush.msra.mxu0 0.0
    %159 = vmatpush.msra.mxu0 0.0
    %160 = vmatpush.msra.mxu0 0.0
    %161 = vmatpush.msra.mxu0 0.0
    %162 = vmatpush.msra.mxu0 0.0
    %163 = vmatpush.msra.mxu0 0.0
    %164 = vmatpush.msra.mxu0 0.0
    %165 = vmatpush.msra.mxu0 %v144
    %166 = vmatmul.f32.gmra.mxu0 %v148
    %v167 = vpop.f32.mrf.mxu0
    %v168 = vadd.f32 %v96, %v167
    %169 = vdwg.mxu0
    %v170 = vmul.f32 %v168, %v101
    %v171 = vrot.slane %v170, 4
    %v172 = vadd.f32 %v170, %v171
    %v173 = vrot.slane %v172, 2
    %v174 = vadd.f32 %v172, %v173
    %v175 = vrot.slane %v174, 1
    %v176 = vadd.f32 %v174, %v175
    %v177 = vmul.f32 %v102, %v176
    %v178 = vadd.f32 %v143, %v177
    %v179 = vrot.slane %v142, 4
    %v180 = vmax.f32 %v142, %v179
    %v181 = vrot.slane %v180, 2
    %v182 = vmax.f32 %v180, %v181
    %v183 = vrot.slane %v182, 1
    %v184 = vmax.f32 %v182, %v183
    %v185 = vsub.f32 %v142, %v184
    %v186 = vmul.f32 %v185, 1.442695
    %v187 = vpow.pop %v186
    %v189 = vsel %vm146, %v135, 0
    %191 = vmatpush.msra.mxu0 0.0
    %192 = vmatpush.msra.mxu0 0.0
    %193 = vmatpush.msra.mxu0 0.0
    %194 = vmatpush.msra.mxu0 0.0
    %195 = vmatpush.msra.mxu0 0.0
    %196 = vmatpush.msra.mxu0 0.0
    %197 = vmatpush.msra.mxu0 0.0
    %198 = vmatpush.msra.mxu0 0.0
    %199 = vmatpush.msra.mxu0 0.0
    %200 = vmatpush.msra.mxu0 0.0
    %201 = vmatpush.msra.mxu0 0.0
    %202 = vmatpush.msra.mxu0 0.0
    %203 = vmatpush.msra.mxu0 0.0
    %204 = vmatpush.msra.mxu0 0.0
    %205 = vmatpush.msra.mxu0 0.0
    %206 = vmatpush.msra.mxu0 %v187
    %207 = vmatmul.f32.gmra.mxu0 %v189
    %v208 = vpop.f32.mrf.mxu0
    %v209 = vadd.f32 0.0, %v208
    %210 = vdwg.mxu0
    %v211 = vadd.f32 %v184, %v140
    %v212 = vlog2.pop %v209
    %v213 = vmul.f32 %v212, 0.6931472
    %v214 = vadd.f32 %v211, %v213
    %v215 = vadd.f32 %v214, %v96
    %vm216 = vcmp.gt.f32.partialorder %v102, 0.0
    %v217 = vsel %vm216, 1, 0
    %v218 = vperm.slane %v217, 0
    %vm219 = vcmp.eq.s32.totalorder %v218, 1
    %v220 = vsel %vm219, %v215, %v142
    %v221 = vsel %vm219, %v101, %v145
    %s222 = scalar_select %p103, 1, 0
    %v223 = vstv %s222
    %vm224 = vcmp.eq.s32.totalorder %v223, 1
    %v225 = vsel %vm224, %v142, %v220
    %v226 = vsel %vm224, %v143, %v178
    %v227 = vsel %vm224, %v144, %v101
    %v228 = vsel %vm224, %v145, %v221
    %s229 = scalar_lea.vmem [#allocation8], 8
    %v230 = vld [vmem:[%s229] sm:$0xff]
    %s231 = scalar_lea.vmem %s1, 1
    %v232 = vld [vmem:[%s231] sm:$0x1]
    %v233 = vperm.slane %v232, 0
    %vm234 = vcmp.eq.s32.totalorder %v94, %v233
    %v235 = vsel %vm234, 1, 0
    %v236 = vcvt.s32.f32 %v235
    %s237 = scalar_lea.vmem %s2, 1
    %v238 = vld [vmem:[%s237] sm:$0x1]
    %239 = vmatpush.msra.mxu0 0.0
    %240 = vmatpush.msra.mxu0 0.0
    %241 = vmatpush.msra.mxu0 0.0
    %242 = vmatpush.msra.mxu0 0.0
    %243 = vmatpush.msra.mxu0 0.0
    %244 = vmatpush.msra.mxu0 0.0
    %245 = vmatpush.msra.mxu0 0.0
    %246 = vmatpush.msra.mxu0 0.0
    %247 = vmatpush.msra.mxu0 0.0
    %248 = vmatpush.msra.mxu0 0.0
    %249 = vmatpush.msra.mxu0 0.0
    %250 = vmatpush.msra.mxu0 0.0
    %251 = vmatpush.msra.mxu0 0.0
    %252 = vmatpush.msra.mxu0 0.0
    %253 = vmatpush.msra.mxu0 0.0
    %254 = vmatpush.msra.mxu0 %v227
    %255 = vmatmul.f32.gmra.mxu0 %v148
    %v256 = vpop.f32.mrf.mxu0
    %v257 = vadd.f32 %v230, %v256
    %258 = vdwg.mxu0
    %v259 = vmul.f32 %v257, %v236
    %v260 = vrot.slane %v259, 4
    %v261 = vadd.f32 %v259, %v260
    %v262 = vrot.slane %v261, 2
    %v263 = vadd.f32 %v261, %v262
    %v264 = vrot.slane %v263, 1
    %v265 = vadd.f32 %v263, %v264
    %v266 = vmul.f32 %v238, %v265
    %v267 = vadd.f32 %v226, %v266
    %v268 = vrot.slane %v225, 4
    %v269 = vmax.f32 %v225, %v268
    %v270 = vrot.slane %v269, 2
    %v271 = vmax.f32 %v269, %v270
    %v272 = vrot.slane %v271, 1
    %v273 = vmax.f32 %v271, %v272
    %v274 = vsub.f32 %v225, %v273
    %v275 = vmul.f32 %v274, 1.442695
    %v276 = vpow.pop %v275
    %277 = vmatpush.msra.mxu0 0.0
    %278 = vmatpush.msra.mxu0 0.0
    %279 = vmatpush.msra.mxu0 0.0
    %280 = vmatpush.msra.mxu0 0.0
    %281 = vmatpush.msra.mxu0 0.0
    %282 = vmatpush.msra.mxu0 0.0
    %283 = vmatpush.msra.mxu0 0.0
    %284 = vmatpush.msra.mxu0 0.0
    %285 = vmatpush.msra.mxu0 0.0
    %286 = vmatpush.msra.mxu0 0.0
    %287 = vmatpush.msra.mxu0 0.0
    %288 = vmatpush.msra.mxu0 0.0
    %289 = vmatpush.msra.mxu0 0.0
    %290 = vmatpush.msra.mxu0 0.0
    %291 = vmatpush.msra.mxu0 0.0
    %292 = vmatpush.msra.mxu0 %v276
    %293 = vmatmul.f32.gmra.mxu0 %v189
    %v294 = vpop.f32.mrf.mxu0
    %v295 = vadd.f32 0.0, %v294
    %296 = vdwg.mxu0
    %v297 = vadd.f32 %v273, %v140
    %v298 = vlog2.pop %v295
    %v299 = vmul.f32 %v298, 0.6931472
    %v300 = vadd.f32 %v297, %v299
    %v301 = vadd.f32 %v300, %v230
    %vm302 = vcmp.gt.f32.partialorder %v238, 0.0
    %v303 = vsel %vm302, 1, 0
    %v304 = vperm.slane %v303, 0
    %vm305 = vcmp.eq.s32.totalorder %v304, 1
    %v306 = vsel %vm305, %v301, %v225
    %v307 = vsel %vm305, %v236, %v228
    %s308 = scalar_lea.vmem [#allocation8], 16
    %v309 = vld [vmem:[%s308] sm:$0xff]
    %s310 = scalar_lea.vmem %s1, 2
    %v311 = vld [vmem:[%s310] sm:$0x1]
    %v312 = vperm.slane %v311, 0
    %vm313 = vcmp.eq.s32.totalorder %v94, %v312
    %v314 = vsel %vm313, 1, 0
    %v315 = vcvt.s32.f32 %v314
    %s316 = scalar_lea.vmem %s2, 2
    %v317 = vld [vmem:[%s316] sm:$0x1]
    %318 = vmatpush.msra.mxu0 0.0
    %319 = vmatpush.msra.mxu0 0.0
    %320 = vmatpush.msra.mxu0 0.0
    %321 = vmatpush.msra.mxu0 0.0
    %322 = vmatpush.msra.mxu0 0.0
    %323 = vmatpush.msra.mxu0 0.0
    %324 = vmatpush.msra.mxu0 0.0
    %325 = vmatpush.msra.mxu0 0.0
    %326 = vmatpush.msra.mxu0 0.0
    %327 = vmatpush.msra.mxu0 0.0
    %328 = vmatpush.msra.mxu0 0.0
    %329 = vmatpush.msra.mxu0 0.0
    %330 = vmatpush.msra.mxu0 0.0
    %331 = vmatpush.msra.mxu0 0.0
    %332 = vmatpush.msra.mxu0 0.0
    %333 = vmatpush.msra.mxu0 %v236
    %334 = vmatmul.f32.gmra.mxu0 %v148
    %v335 = vpop.f32.mrf.mxu0
    %v336 = vadd.f32 %v309, %v335
    %337 = vdwg.mxu0
    %v338 = vmul.f32 %v336, %v315
    %v339 = vrot.slane %v338, 4
    %v340 = vadd.f32 %v338, %v339
    %v341 = vrot.slane %v340, 2
    %v342 = vadd.f32 %v340, %v341
    %v343 = vrot.slane %v342, 1
    %v344 = vadd.f32 %v342, %v343
    %v345 = vmul.f32 %v317, %v344
    %v346 = vadd.f32 %v267, %v345
    %v347 = vrot.slane %v306, 4
    %v348 = vmax.f32 %v306, %v347
    %v349 = vrot.slane %v348, 2
    %v350 = vmax.f32 %v348, %v349
    %v351 = vrot.slane %v350, 1
    %v352 = vmax.f32 %v350, %v351
    %v353 = vsub.f32 %v306, %v352
    %v354 = vmul.f32 %v353, 1.442695
    %v355 = vpow.pop %v354
    %356 = vmatpush.msra.mxu0 0.0
    %357 = vmatpush.msra.mxu0 0.0
    %358 = vmatpush.msra.mxu0 0.0
    %359 = vmatpush.msra.mxu0 0.0
    %360 = vmatpush.msra.mxu0 0.0
    %361 = vmatpush.msra.mxu0 0.0
    %362 = vmatpush.msra.mxu0 0.0
    %363 = vmatpush.msra.mxu0 0.0
    %364 = vmatpush.msra.mxu0 0.0
    %365 = vmatpush.msra.mxu0 0.0
    %366 = vmatpush.msra.mxu0 0.0
    %367 = vmatpush.msra.mxu0 0.0
    %368 = vmatpush.msra.mxu0 0.0
    %369 = vmatpush.msra.mxu0 0.0
    %370 = vmatpush.msra.mxu0 0.0
    %371 = vmatpush.msra.mxu0 %v355
    %372 = vmatmul.f32.gmra.mxu0 %v189
    %v373 = vpop.f32.mrf.mxu0
    %v374 = vadd.f32 0.0, %v373
    %375 = vdwg.mxu0
    %v376 = vadd.f32 %v352, %v140
    %v377 = vlog2.pop %v374
    %v378 = vmul.f32 %v377, 0.6931472
    %v379 = vadd.f32 %v376, %v378
    %v380 = vadd.f32 %v379, %v309
    %vm381 = vcmp.gt.f32.partialorder %v317, 0.0
    %v382 = vsel %vm381, 1, 0
    %v383 = vperm.slane %v382, 0
    %vm384 = vcmp.eq.s32.totalorder %v383, 1
    %v385 = vsel %vm384, %v380, %v306
    %v386 = vsel %vm384, %v315, %v307
    %s387 = scalar_lea.vmem [#allocation8], 24
    %v388 = vld [vmem:[%s387] sm:$0xff]
    %s389 = scalar_lea.vmem %s1, 3
    %v390 = vld [vmem:[%s389] sm:$0x1]
    %v391 = vperm.slane %v390, 0
    %vm392 = vcmp.eq.s32.totalorder %v94, %v391
    %v393 = vsel %vm392, 1, 0
    %v394 = vcvt.s32.f32 %v393
    %s395 = scalar_lea.vmem %s2, 3
    %v396 = vld [vmem:[%s395] sm:$0x1]
    %397 = vmatpush.msra.mxu0 0.0
    %398 = vmatpush.msra.mxu0 0.0
    %399 = vmatpush.msra.mxu0 0.0
    %400 = vmatpush.msra.mxu0 0.0
    %401 = vmatpush.msra.mxu0 0.0
    %402 = vmatpush.msra.mxu0 0.0
    %403 = vmatpush.msra.mxu0 0.0
    %404 = vmatpush.msra.mxu0 0.0
    %405 = vmatpush.msra.mxu0 0.0
    %406 = vmatpush.msra.mxu0 0.0
    %407 = vmatpush.msra.mxu0 0.0
    %408 = vmatpush.msra.mxu0 0.0
    %409 = vmatpush.msra.mxu0 0.0
    %410 = vmatpush.msra.mxu0 0.0
    %411 = vmatpush.msra.mxu0 0.0
    %412 = vmatpush.msra.mxu0 %v315
    %413 = vmatmul.f32.gmra.mxu0 %v148
    %v414 = vpop.f32.mrf.mxu0
    %v415 = vadd.f32 %v388, %v414
    %416 = vdwg.mxu0
    %v417 = vmul.f32 %v415, %v394
    %v418 = vrot.slane %v417, 4
    %v419 = vadd.f32 %v417, %v418
    %v420 = vrot.slane %v419, 2
    %v421 = vadd.f32 %v419, %v420
    %v422 = vrot.slane %v421, 1
    %v423 = vadd.f32 %v421, %v422
    %v424 = vmul.f32 %v396, %v423
    %v425 = vadd.f32 %v346, %v424
    %v426 = vrot.slane %v385, 4
    %v427 = vmax.f32 %v385, %v426
    %v428 = vrot.slane %v427, 2
    %v429 = vmax.f32 %v427, %v428
    %v430 = vrot.slane %v429, 1
    %v431 = vmax.f32 %v429, %v430
    %v432 = vsub.f32 %v385, %v431
    %v433 = vmul.f32 %v432, 1.442695
    %v434 = vpow.pop %v433
    %435 = vmatpush.msra.mxu0 0.0
    %436 = vmatpush.msra.mxu0 0.0
    %437 = vmatpush.msra.mxu0 0.0
    %438 = vmatpush.msra.mxu0 0.0
    %439 = vmatpush.msra.mxu0 0.0
    %440 = vmatpush.msra.mxu0 0.0
    %441 = vmatpush.msra.mxu0 0.0
    %442 = vmatpush.msra.mxu0 0.0
    %443 = vmatpush.msra.mxu0 0.0
    %444 = vmatpush.msra.mxu0 0.0
    %445 = vmatpush.msra.mxu0 0.0
    %446 = vmatpush.msra.mxu0 0.0
    %447 = vmatpush.msra.mxu0 0.0
    %448 = vmatpush.msra.mxu0 0.0
    %449 = vmatpush.msra.mxu0 0.0
    %450 = vmatpush.msra.mxu0 %v434
    %451 = vmatmul.f32.gmra.mxu0 %v189
    %v452 = vpop.f32.mrf.mxu0
    %v453 = vadd.f32 0.0, %v452
    %454 = vdwg.mxu0
    %v455 = vadd.f32 %v431, %v140
    %v456 = vlog2.pop %v453
    %v457 = vmul.f32 %v456, 0.6931472
    %v458 = vadd.f32 %v455, %v457
    %v459 = vadd.f32 %v458, %v388
    %vm460 = vcmp.gt.f32.partialorder %v396, 0.0
    %v461 = vsel %vm460, 1, 0
    %v462 = vperm.slane %v461, 0
    %vm463 = vcmp.eq.s32.totalorder %v462, 1
    %v464 = vsel %vm463, %v459, %v385
    %v465 = vsel %vm463, %v394, %v386
    %s466 = scalar_lea.vmem [#allocation8], 32
    %v467 = vld [vmem:[%s466] sm:$0xff]
    %s468 = scalar_lea.vmem %s1, 4
    %v469 = vld [vmem:[%s468] sm:$0x1]
    %v470 = vperm.slane %v469, 0
    %vm471 = vcmp.eq.s32.totalorder %v94, %v470
    %v472 = vsel %vm471, 1, 0
    %v473 = vcvt.s32.f32 %v472
    %s474 = scalar_lea.vmem %s2, 4
    %v475 = vld [vmem:[%s474] sm:$0x1]
    %476 = vmatpush.msra.mxu0 0.0
    %477 = vmatpush.msra.mxu0 0.0
    %478 = vmatpush.msra.mxu0 0.0
    %479 = vmatpush.msra.mxu0 0.0
    %480 = vmatpush.msra.mxu0 0.0
    %481 = vmatpush.msra.mxu0 0.0
    %482 = vmatpush.msra.mxu0 0.0
    %483 = vmatpush.msra.mxu0 0.0
    %484 = vmatpush.msra.mxu0 0.0
    %485 = vmatpush.msra.mxu0 0.0
    %486 = vmatpush.msra.mxu0 0.0
    %487 = vmatpush.msra.mxu0 0.0
    %488 = vmatpush.msra.mxu0 0.0
    %489 = vmatpush.msra.mxu0 0.0
    %490 = vmatpush.msra.mxu0 0.0
    %491 = vmatpush.msra.mxu0 %v394
    %492 = vmatmul.f32.gmra.mxu0 %v148
    %v493 = vpop.f32.mrf.mxu0
    %v494 = vadd.f32 %v467, %v493
    %495 = vdwg.mxu0
    %v496 = vmul.f32 %v494, %v473
    %v497 = vrot.slane %v496, 4
    %v498 = vadd.f32 %v496, %v497
    %v499 = vrot.slane %v498, 2
    %v500 = vadd.f32 %v498, %v499
    %v501 = vrot.slane %v500, 1
    %v502 = vadd.f32 %v500, %v501
    %v503 = vmul.f32 %v475, %v502
    %v504 = vadd.f32 %v425, %v503
    %v505 = vrot.slane %v464, 4
    %v506 = vmax.f32 %v464, %v505
    %v507 = vrot.slane %v506, 2
    %v508 = vmax.f32 %v506, %v507
    %v509 = vrot.slane %v508, 1
    %v510 = vmax.f32 %v508, %v509
    %v511 = vsub.f32 %v464, %v510
    %v512 = vmul.f32 %v511, 1.442695
    %v513 = vpow.pop %v512
    %514 = vmatpush.msra.mxu0 0.0
    %515 = vmatpush.msra.mxu0 0.0
    %516 = vmatpush.msra.mxu0 0.0
    %517 = vmatpush.msra.mxu0 0.0
    %518 = vmatpush.msra.mxu0 0.0
    %519 = vmatpush.msra.mxu0 0.0
    %520 = vmatpush.msra.mxu0 0.0
    %521 = vmatpush.msra.mxu0 0.0
    %522 = vmatpush.msra.mxu0 0.0
    %523 = vmatpush.msra.mxu0 0.0
    %524 = vmatpush.msra.mxu0 0.0
    %525 = vmatpush.msra.mxu0 0.0
    %526 = vmatpush.msra.mxu0 0.0
    %527 = vmatpush.msra.mxu0 0.0
    %528 = vmatpush.msra.mxu0 0.0
    %529 = vmatpush.msra.mxu0 %v513
    %530 = vmatmul.f32.gmra.mxu0 %v189
    %v531 = vpop.f32.mrf.mxu0
    %v532 = vadd.f32 0.0, %v531
    %533 = vdwg.mxu0
    %v534 = vadd.f32 %v510, %v140
    %v535 = vlog2.pop %v532
    %v536 = vmul.f32 %v535, 0.6931472
    %v537 = vadd.f32 %v534, %v536
    %v538 = vadd.f32 %v537, %v467
    %vm539 = vcmp.gt.f32.partialorder %v475, 0.0
    %v540 = vsel %vm539, 1, 0
    %v541 = vperm.slane %v540, 0
    %vm542 = vcmp.eq.s32.totalorder %v541, 1
    %v543 = vsel %vm542, %v538, %v464
    %v544 = vsel %vm542, %v473, %v465
    %s545 = scalar_lea.vmem [#allocation8], 40
    %v546 = vld [vmem:[%s545] sm:$0xff]
    %s547 = scalar_lea.vmem %s1, 5
    %v548 = vld [vmem:[%s547] sm:$0x1]
    %v549 = vperm.slane %v548, 0
    %vm550 = vcmp.eq.s32.totalorder %v94, %v549
    %v551 = vsel %vm550, 1, 0
    %v552 = vcvt.s32.f32 %v551
    %s553 = scalar_lea.vmem %s2, 5
    %v554 = vld [vmem:[%s553] sm:$0x1]
    %555 = vmatpush.msra.mxu0 0.0
    %556 = vmatpush.msra.mxu0 0.0
    %557 = vmatpush.msra.mxu0 0.0
    %558 = vmatpush.msra.mxu0 0.0
    %559 = vmatpush.msra.mxu0 0.0
    %560 = vmatpush.msra.mxu0 0.0
    %561 = vmatpush.msra.mxu0 0.0
    %562 = vmatpush.msra.mxu0 0.0
    %563 = vmatpush.msra.mxu0 0.0
    %564 = vmatpush.msra.mxu0 0.0
    %565 = vmatpush.msra.mxu0 0.0
    %566 = vmatpush.msra.mxu0 0.0
    %567 = vmatpush.msra.mxu0 0.0
    %568 = vmatpush.msra.mxu0 0.0
    %569 = vmatpush.msra.mxu0 0.0
    %570 = vmatpush.msra.mxu0 %v473
    %571 = vmatmul.f32.gmra.mxu0 %v148
    %v572 = vpop.f32.mrf.mxu0
    %v573 = vadd.f32 %v546, %v572
    %574 = vdwg.mxu0
    %v575 = vmul.f32 %v573, %v552
    %v576 = vrot.slane %v575, 4
    %v577 = vadd.f32 %v575, %v576
    %v578 = vrot.slane %v577, 2
    %v579 = vadd.f32 %v577, %v578
    %v580 = vrot.slane %v579, 1
    %v581 = vadd.f32 %v579, %v580
    %v582 = vmul.f32 %v554, %v581
    %v583 = vadd.f32 %v504, %v582
    %v584 = vrot.slane %v543, 4
    %v585 = vmax.f32 %v543, %v584
    %v586 = vrot.slane %v585, 2
    %v587 = vmax.f32 %v585, %v586
    %v588 = vrot.slane %v587, 1
    %v589 = vmax.f32 %v587, %v588
    %v590 = vsub.f32 %v543, %v589
    %v591 = vmul.f32 %v590, 1.442695
    %v592 = vpow.pop %v591
    %593 = vmatpush.msra.mxu0 0.0
    %594 = vmatpush.msra.mxu0 0.0
    %595 = vmatpush.msra.mxu0 0.0
    %596 = vmatpush.msra.mxu0 0.0
    %597 = vmatpush.msra.mxu0 0.0
    %598 = vmatpush.msra.mxu0 0.0
    %599 = vmatpush.msra.mxu0 0.0
    %600 = vmatpush.msra.mxu0 0.0
    %601 = vmatpush.msra.mxu0 0.0
    %602 = vmatpush.msra.mxu0 0.0
    %603 = vmatpush.msra.mxu0 0.0
    %604 = vmatpush.msra.mxu0 0.0
    %605 = vmatpush.msra.mxu0 0.0
    %606 = vmatpush.msra.mxu0 0.0
    %607 = vmatpush.msra.mxu0 0.0
    %608 = vmatpush.msra.mxu0 %v592
    %609 = vmatmul.f32.gmra.mxu0 %v189
    %v610 = vpop.f32.mrf.mxu0
    %v611 = vadd.f32 0.0, %v610
    %612 = vdwg.mxu0
    %v613 = vadd.f32 %v589, %v140
    %v614 = vlog2.pop %v611
    %v615 = vmul.f32 %v614, 0.6931472
    %v616 = vadd.f32 %v613, %v615
    %v617 = vadd.f32 %v616, %v546
    %vm618 = vcmp.gt.f32.partialorder %v554, 0.0
    %v619 = vsel %vm618, 1, 0
    %v620 = vperm.slane %v619, 0
    %vm621 = vcmp.eq.s32.totalorder %v620, 1
    %v622 = vsel %vm621, %v617, %v543
    %v623 = vsel %vm621, %v552, %v544
    %s624 = scalar_lea.vmem [#allocation8], 48
    %v625 = vld [vmem:[%s624] sm:$0xff]
    %s626 = scalar_lea.vmem %s1, 6
    %v627 = vld [vmem:[%s626] sm:$0x1]
    %v628 = vperm.slane %v627, 0
    %vm629 = vcmp.eq.s32.totalorder %v94, %v628
    %v630 = vsel %vm629, 1, 0
    %v631 = vcvt.s32.f32 %v630
    %s632 = scalar_lea.vmem %s2, 6
    %v633 = vld [vmem:[%s632] sm:$0x1]
    %634 = vmatpush.msra.mxu0 0.0
    %635 = vmatpush.msra.mxu0 0.0
    %636 = vmatpush.msra.mxu0 0.0
    %637 = vmatpush.msra.mxu0 0.0
    %638 = vmatpush.msra.mxu0 0.0
    %639 = vmatpush.msra.mxu0 0.0
    %640 = vmatpush.msra.mxu0 0.0
    %641 = vmatpush.msra.mxu0 0.0
    %642 = vmatpush.msra.mxu0 0.0
    %643 = vmatpush.msra.mxu0 0.0
    %644 = vmatpush.msra.mxu0 0.0
    %645 = vmatpush.msra.mxu0 0.0
    %646 = vmatpush.msra.mxu0 0.0
    %647 = vmatpush.msra.mxu0 0.0
    %648 = vmatpush.msra.mxu0 0.0
    %649 = vmatpush.msra.mxu0 %v552
    %650 = vmatmul.f32.gmra.mxu0 %v148
    %v651 = vpop.f32.mrf.mxu0
    %v652 = vadd.f32 %v625, %v651
    %653 = vdwg.mxu0
    %v654 = vmul.f32 %v652, %v631
    %v655 = vrot.slane %v654, 4
    %v656 = vadd.f32 %v654, %v655
    %v657 = vrot.slane %v656, 2
    %v658 = vadd.f32 %v656, %v657
    %v659 = vrot.slane %v658, 1
    %v660 = vadd.f32 %v658, %v659
    %v661 = vmul.f32 %v633, %v660
    %v662 = vadd.f32 %v583, %v661
    %v663 = vrot.slane %v622, 4
    %v664 = vmax.f32 %v622, %v663
    %v665 = vrot.slane %v664, 2
    %v666 = vmax.f32 %v664, %v665
    %v667 = vrot.slane %v666, 1
    %v668 = vmax.f32 %v666, %v667
    %v669 = vsub.f32 %v622, %v668
    %v670 = vmul.f32 %v669, 1.442695
    %v671 = vpow.pop %v670
    %672 = vmatpush.msra.mxu0 0.0
    %673 = vmatpush.msra.mxu0 0.0
    %674 = vmatpush.msra.mxu0 0.0
    %675 = vmatpush.msra.mxu0 0.0
    %676 = vmatpush.msra.mxu0 0.0
    %677 = vmatpush.msra.mxu0 0.0
    %678 = vmatpush.msra.mxu0 0.0
    %679 = vmatpush.msra.mxu0 0.0
    %680 = vmatpush.msra.mxu0 0.0
    %681 = vmatpush.msra.mxu0 0.0
    %682 = vmatpush.msra.mxu0 0.0
    %683 = vmatpush.msra.mxu0 0.0
    %684 = vmatpush.msra.mxu0 0.0
    %685 = vmatpush.msra.mxu0 0.0
    %686 = vmatpush.msra.mxu0 0.0
    %687 = vmatpush.msra.mxu0 %v671
    %688 = vmatmul.f32.gmra.mxu0 %v189
    %v689 = vpop.f32.mrf.mxu0
    %v690 = vadd.f32 0.0, %v689
    %691 = vdwg.mxu0
    %v692 = vadd.f32 %v668, %v140
    %v693 = vlog2.pop %v690
    %v694 = vmul.f32 %v693, 0.6931472
    %v695 = vadd.f32 %v692, %v694
    %v696 = vadd.f32 %v695, %v625
    %vm697 = vcmp.gt.f32.partialorder %v633, 0.0
    %v698 = vsel %vm697, 1, 0
    %v699 = vperm.slane %v698, 0
    %vm700 = vcmp.eq.s32.totalorder %v699, 1
    %v701 = vsel %vm700, %v696, %v622
    %v702 = vsel %vm700, %v631, %v623
    %s703 = scalar_lea.vmem [#allocation8], 56
    %v704 = vld [vmem:[%s703] sm:$0xff]
    %s705 = scalar_lea.vmem %s1, 7
    %v706 = vld [vmem:[%s705] sm:$0x1]
    %v707 = vperm.slane %v706, 0
    %vm708 = vcmp.eq.s32.totalorder %v94, %v707
    %v709 = vsel %vm708, 1, 0
    %v710 = vcvt.s32.f32 %v709
    %s711 = scalar_lea.vmem %s2, 7
    %v712 = vld [vmem:[%s711] sm:$0x1]
    %713 = vmatpush.msra.mxu0 0.0
    %714 = vmatpush.msra.mxu0 0.0
    %715 = vmatpush.msra.mxu0 0.0
    %716 = vmatpush.msra.mxu0 0.0
    %717 = vmatpush.msra.mxu0 0.0
    %718 = vmatpush.msra.mxu0 0.0
    %719 = vmatpush.msra.mxu0 0.0
    %720 = vmatpush.msra.mxu0 0.0
    %721 = vmatpush.msra.mxu0 0.0
    %722 = vmatpush.msra.mxu0 0.0
    %723 = vmatpush.msra.mxu0 0.0
    %724 = vmatpush.msra.mxu0 0.0
    %725 = vmatpush.msra.mxu0 0.0
    %726 = vmatpush.msra.mxu0 0.0
    %727 = vmatpush.msra.mxu0 0.0
    %728 = vmatpush.msra.mxu0 %v631
    %729 = vmatmul.f32.gmra.mxu0 %v148
    %v730 = vpop.f32.mrf.mxu0
    %v731 = vadd.f32 %v704, %v730
    %732 = vdwg.mxu0
    %v733 = vmul.f32 %v731, %v710
    %v734 = vrot.slane %v733, 4
    %v735 = vadd.f32 %v733, %v734
    %v736 = vrot.slane %v735, 2
    %v737 = vadd.f32 %v735, %v736
    %v738 = vrot.slane %v737, 1
    %v739 = vadd.f32 %v737, %v738
    %v740 = vmul.f32 %v712, %v739
    %v741 = vadd.f32 %v662, %v740
    %v742 = vrot.slane %v701, 4
    %v743 = vmax.f32 %v701, %v742
    %v744 = vrot.slane %v743, 2
    %v745 = vmax.f32 %v743, %v744
    %v746 = vrot.slane %v745, 1
    %v747 = vmax.f32 %v745, %v746
    %v748 = vsub.f32 %v701, %v747
    %v749 = vmul.f32 %v748, 1.442695
    %v750 = vpow.pop %v749
    %751 = vmatpush.msra.mxu0 0.0
    %752 = vmatpush.msra.mxu0 0.0
    %753 = vmatpush.msra.mxu0 0.0
    %754 = vmatpush.msra.mxu0 0.0
    %755 = vmatpush.msra.mxu0 0.0
    %756 = vmatpush.msra.mxu0 0.0
    %757 = vmatpush.msra.mxu0 0.0
    %758 = vmatpush.msra.mxu0 0.0
    %759 = vmatpush.msra.mxu0 0.0
    %760 = vmatpush.msra.mxu0 0.0
    %761 = vmatpush.msra.mxu0 0.0
    %762 = vmatpush.msra.mxu0 0.0
    %763 = vmatpush.msra.mxu0 0.0
    %764 = vmatpush.msra.mxu0 0.0
    %765 = vmatpush.msra.mxu0 0.0
    %766 = vmatpush.msra.mxu0 %v750
    %767 = vmatmul.f32.gmra.mxu0 %v189
    %v768 = vpop.f32.mrf.mxu0
    %v769 = vadd.f32 0.0, %v768
    %770 = vdwg.mxu0
    %v771 = vadd.f32 %v747, %v140
    %v772 = vlog2.pop %v769
    %v773 = vmul.f32 %v772, 0.6931472
    %v774 = vadd.f32 %v771, %v773
    %v775 = vadd.f32 %v774, %v704
    %vm776 = vcmp.gt.f32.partialorder %v712, 0.0
    %v777 = vsel %vm776, 1, 0
    %v778 = vperm.slane %v777, 0
    %vm779 = vcmp.eq.s32.totalorder %v778, 1
    %v780 = vsel %vm779, %v775, %v701
    %v781 = vsel %vm779, %v710, %v702
    %782 = vst [vmem:[#allocation2] sm:$0xff] %v780
    %783 = vst [vmem:[#allocation3] sm:$0x1] %v741
    %784 = vst [vmem:[#allocation4] sm:$0xff] %v710
    %785 = vst [vmem:[#allocation5] sm:$0xff] %v781
    // Predicated region
    $region62: #{tpu_custom_call.1} parent=1 // pred_check
      %p786 = pneg %p103
    $region63: #{tpu_custom_call.1} parent=1 // pred_check_branch
      %788 = sbr.rel (%p786) target = $region65
    $region64: #{tpu_custom_call.1} parent=1 // pred_region
      %v789 = vld [vmem:[%s4] sm:$0xff]
      %791 = vset.pattern.permute.xlu0 0
      %792 = vperm.xlu0 %791, %v789
      %v793 = vpop.permute.xlu0 %792
      %v795 = vmul.f32 %v793, %v781
      %v796 = vrot.slane %v795, 4
      %v797 = vadd.f32 %v795, %v796
      %v798 = vrot.slane %v797, 2
      %v799 = vadd.f32 %v797, %v798
      %v800 = vrot.slane %v799, 1
      %v801 = vadd.f32 %v799, %v800
      %v802 = vadd.f32 %v741, %v801
      %v803 = vadd.f32 %v780, %v793
      %v804 = vrot.slane %v803, 4
      %v805 = vmax.f32 %v803, %v804
      %v806 = vrot.slane %v805, 2
      %v807 = vmax.f32 %v805, %v806
      %v808 = vrot.slane %v807, 1
      %v809 = vmax.f32 %v807, %v808
      %v810 = vsub.f32 %v803, %v809
      %v811 = vmul.f32 %v810, 1.442695
      %v812 = vpow.pop %v811
      %v813 = vrot.slane %v812, 4
      %v814 = vadd.f32 %v812, %v813
      %v815 = vrot.slane %v814, 2
      %v816 = vadd.f32 %v814, %v815
      %v817 = vrot.slane %v816, 1
      %v818 = vadd.f32 %v816, %v817
      %v819 = vlog2.pop %v818
      %v820 = vmul.f32 %v819, 0.6931472
      %v821 = vadd.f32 %v809, %v820
      %v822 = vlaneseq
      %v823 = vand.u32 %v822, 127
      %vm824 = vcmp.lt.s32.totalorder %v823, 2
      %v825 = vsel %vm824, 1, 0
      %v826 = vcvt.s32.f32 %v825
      %v827 = vsub.f32 %v821, %v802
      %v828 = vmul.f32 %v827, %v826
      %vm829 = vcmask 1040384
      %v830 = vsel %vm829, %v828, 0.0
      %831 = vadd.xlane.f32.xlu0 %v830
      %v832 = vpop.xlane.xlu0 %831
      %v833 = vrot.slane %v832, 4
      %v834 = vadd.f32 %v832, %v833
      %v835 = vrot.slane %v834, 2
      %v836 = vadd.f32 %v834, %v835
      %v837 = vrot.slane %v836, 1
      %v838 = vadd.f32 %v836, %v837
      %s839 = vtos %v838
      %v840 = vrcp.pop 2.0
      %v841 = vmul.f32 2.0, %v840
      %v842 = vsub.f32 1.0, %v841
      %v843 = vmul.f32 %v840, %v842
      %v844 = vadd.f32 %v840, %v843
      %vm845 = vweird.f32 %v840
      %v846 = vsel %vm845, %v840, %v844
      %s847 = vtos %v846
      %s848 = smul.f32 %s839, %s847
      %v849 = vld [vmem:[#allocation13] sm:$0xff]
      %v850 = vld [vmem:[%s7] sm:$0x1]
      %v851 = vperm.slane %v850, 0
      %vm852 = vcmp.eq.s32.totalorder %v94, %v851
      %v853 = vsel %vm852, 1, 0
      %v854 = vcvt.s32.f32 %v853
      %v855 = vrot.slane %v849, 4
      %v856 = vmax.f32 %v849, %v855
      %v857 = vrot.slane %v856, 2
      %v858 = vmax.f32 %v856, %v857
      %v859 = vrot.slane %v858, 1
      %v860 = vmax.f32 %v858, %v859
      %v861 = vsub.f32 %v849, %v860
      %v862 = vmul.f32 %v861, 1.442695
      %v863 = vpow.pop %v862
      %v864 = vrot.slane %v863, 4
      %v865 = vadd.f32 %v863, %v864
      %v866 = vrot.slane %v865, 2
      %v867 = vadd.f32 %v865, %v866
      %v868 = vrot.slane %v867, 1
      %v869 = vadd.f32 %v867, %v868
      %v870 = vlog2.pop %v869
      %v871 = vmul.f32 %v870, 0.6931472
      %v872 = vadd.f32 %v860, %v871
      %v873 = vmul.f32 %v849, %v854
      %v874 = vrot.slane %v873, 4
      %v875 = vadd.f32 %v873, %v874
      %v876 = vrot.slane %v875, 2
      %v877 = vadd.f32 %v875, %v876
      %v878 = vrot.slane %v877, 1
      %v879 = vadd.f32 %v877, %v878
      %v880 = vsub.f32 %v872, %v879
      %vm881 = vcmp.lt.s32.totalorder %v823, 6
      %v882 = vsel %vm881, 1, 0
      %v883 = vcvt.s32.f32 %v882
      %vm884 = vcmp.ne.s32.totalorder %v850, 0
      %v885 = vsel %vm884, 1, 0
      %v886 = vcvt.s32.f32 %v885
      %v887 = vmul.f32 %v883, %v886
      %v888 = vmul.f32 %v880, %v887
      %v889 = vsel %vm829, %v888, 0.0
      %890 = vadd.xlane.f32.xlu0 %v889
      %v891 = vpop.xlane.xlu0 %890
      %v892 = vrot.slane %v891, 4
      %v893 = vadd.f32 %v891, %v892
      %v894 = vrot.slane %v893, 2
      %v895 = vadd.f32 %v893, %v894
      %v896 = vrot.slane %v895, 1
      %v897 = vadd.f32 %v895, %v896
      %s898 = vtos %v897
      %v899 = vsel %vm829, %v887, 0.0
      %900 = vadd.xlane.f32.xlu0 %v899
      %v901 = vpop.xlane.xlu0 %900
      %v902 = vrot.slane %v901, 4
      %v903 = vadd.f32 %v901, %v902
      %v904 = vrot.slane %v903, 2
      %v905 = vadd.f32 %v903, %v904
      %v906 = vrot.slane %v905, 1
      %v907 = vadd.f32 %v905, %v906
      %s908 = vtos %v907
      %s909 = smax.f32 %s908, 1.0
      %v910 = vstv %s909
      %v911 = vrcp.pop %v910
      %v912 = vmul.f32 %v910, %v911
      %v913 = vsub.f32 1.0, %v912
      %v914 = vmul.f32 %v911, %v913
      %v915 = vadd.f32 %v911, %v914
      %vm916 = vweird.f32 %v910
      %vm917 = vweird.f32 %v911
      %vm918 = vmor %vm916, %vm917
      %v919 = vsel %vm918, %v911, %v915
      %v920 = vand.u32 2147483647, %v910
      %vm921 = vcmp.eq.f32.partialorder %v920, 8.507059e+37
      %v922 = vand.u32 %v910, 2147483648
      %v923 = vor.u32 1.1754944e-38, %v922
      %v924 = vsel %vm921, %v923, %v919
      %s925 = vtos %v924
      %s926 = smul.f32 %s898, %s925
      %v927 = vld [vmem:[#allocation14] sm:$0xff]
      %v928 = vld [vmem:[%s9] sm:$0x1]
      %v929 = vperm.slane %v928, 0
      %vm930 = vcmp.eq.s32.totalorder %v94, %v929
      %v931 = vsel %vm930, 1, 0
      %v932 = vcvt.s32.f32 %v931
      %v933 = vrot.slane %v927, 4
      %v934 = vmax.f32 %v927, %v933
      %v935 = vrot.slane %v934, 2
      %v936 = vmax.f32 %v934, %v935
      %v937 = vrot.slane %v936, 1
      %v938 = vmax.f32 %v936, %v937
      %v939 = vsub.f32 %v927, %v938
      %v940 = vmul.f32 %v939, 1.442695
      %v941 = vpow.pop %v940
      %v942 = vrot.slane %v941, 4
      %v943 = vadd.f32 %v941, %v942
      %v944 = vrot.slane %v943, 2
      %v945 = vadd.f32 %v943, %v944
      %v946 = vrot.slane %v945, 1
      %v947 = vadd.f32 %v945, %v946
      %v948 = vlog2.pop %v947
      %v949 = vmul.f32 %v948, 0.6931472
      %v950 = vadd.f32 %v938, %v949
      %v951 = vmul.f32 %v927, %v932
      %v952 = vrot.slane %v951, 4
      %v953 = vadd.f32 %v951, %v952
      %v954 = vrot.slane %v953, 2
      %v955 = vadd.f32 %v953, %v954
      %v956 = vrot.slane %v955, 1
      %v957 = vadd.f32 %v955, %v956
      %v958 = vsub.f32 %v950, %v957
      %v959 = vmul.f32 %v958, %v826
      %v960 = vsel %vm829, %v959, 0.0
      %961 = vadd.xlane.f32.xlu0 %v960
      %v962 = vpop.xlane.xlu0 %961
      %v963 = vrot.slane %v962, 4
      %v964 = vadd.f32 %v962, %v963
      %v965 = vrot.slane %v964, 2
      %v966 = vadd.f32 %v964, %v965
      %v967 = vrot.slane %v966, 1
      %v968 = vadd.f32 %v966, %v967
      %s969 = vtos %v968
      %v970 = vsel %vm829, %v826, 0.0
      %971 = vadd.xlane.f32.xlu0 %v970
      %v972 = vpop.xlane.xlu0 %971
      %v973 = vrot.slane %v972, 4
      %v974 = vadd.f32 %v972, %v973
      %v975 = vrot.slane %v974, 2
      %v976 = vadd.f32 %v974, %v975
      %v977 = vrot.slane %v976, 1
      %v978 = vadd.f32 %v976, %v977
      %s979 = vtos %v978
      %s980 = smax.f32 %s979, 1.0
      %v981 = vstv %s980
      %v982 = vrcp.pop %v981
      %v983 = vmul.f32 %v981, %v982
      %v984 = vsub.f32 1.0, %v983
      %v985 = vmul.f32 %v982, %v984
      %v986 = vadd.f32 %v982, %v985
      %vm987 = vweird.f32 %v981
      %vm988 = vweird.f32 %v982
      %vm989 = vmor %vm987, %vm988
      %v990 = vsel %vm989, %v982, %v986
      %v991 = vand.u32 2147483647, %v981
      %vm992 = vcmp.eq.f32.partialorder %v991, 8.507059e+37
      %v993 = vand.u32 %v981, 2147483648
      %v994 = vor.u32 1.1754944e-38, %v993
      %v995 = vsel %vm992, %v994, %v990
      %s996 = vtos %v995
      %s997 = smul.f32 %s969, %s996
      %s998 = sadd.f32 %s848, %s926
      %s999 = sadd.f32 %s998, %s997
      %s1000 = smul.f32 %s999, 0.33333334
      %s1001 = scalar_lea.smem [#allocation16], 0
      %1002 = sst [smem:[%s1001]] %s1000
      %s1003 = scalar_lea.smem [#allocation16], 1
      %1004 = sst [smem:[%s1003]] %s848
      %s1005 = scalar_lea.smem [#allocation16], 2
      %1006 = sst [smem:[%s1005]] %s926
      %s1007 = scalar_lea.smem [#allocation16], 3
      %1008 = sst [smem:[%s1007]] %s997
    $region65: #{tpu_custom_call.1} parent=1 // pred_fallthru
      _
    // Predicated region
    $region66: #{tpu_custom_call.1} parent=1 // pred_check
      _
    $region67: #{tpu_custom_call.1} parent=1 // pred_check_branch
      %1010 = sbr.rel (0) target = $region69
    $region68: #{tpu_custom_call.1} parent=1 // pred_region
      %1012 = vsyncadd [#allocation10], 0
      %s1014 = sshll.u32 %s10, 4
      %s1015 = int_to_ptr.hbm [resolvable:$true] %s1014
      %1017 = dma.smem_to_hbm [#allocation16], 16, %s1015, [#allocation10]
    $region69: #{tpu_custom_call.1} parent=1 // pred_fallthru
      _
    // Predicated region
    $region70: #{tpu_custom_call.1} parent=1 // pred_check
      _
    $region71: #{tpu_custom_call.1} parent=1 // pred_check_branch
      %1019 = sbr.rel (0) target = $region73
    $region72: #{tpu_custom_call.1} parent=1 // pred_region
      %1021 = dma.done [#allocation10], 16
    $region73: #{tpu_custom_call.1} parent=1 // pred_fallthru
      _
    %1022 = sfence
    %1023 = vsyncpa [#allocation9], 1
    %1024 = vsyncpa [#allocation12], 1
    %1025 = vsyncpa [#allocation15], 1
    %1026 = vsyncpa [#allocation10], 1

</llo_original>
